<compile_context>
chip_gen: v6e
topology: v6e:2x2x1
jax: 0.10.0
libtpu: 0.0.40
codegen_flags: <defaults>
</compile_context>

<pallas_src>
import functools

import jax
import jax.numpy as jnp
from jax.experimental import pallas as pl
from jax.experimental.pallas import tpu as pltpu

ACT_NONE, ACT_RELU, ACT_SIGMOID = 0, 1, 2
EPS = 1e-5
VMEM_LIMIT = 48 * 1024 * 1024  # <= v7x 64 MiB physical; well under v5e/v6e 128 MiB

# Small stand-in for the module-level constant `w = 150` (bound of the sampled volume).
W_BOUND = 16


def _round_up(x, m):
    return (x + m - 1) // m * m


# ----------------------------------------------------------------------------------
# Pallas kernels
# ----------------------------------------------------------------------------------
def _apply_act(r, act):
    if act == ACT_RELU:
        return jnp.maximum(r, 0.0)
    if act == ACT_SIGMOID:
        return jax.nn.sigmoid(r)
    return r


def _mm_kernel(a_ref, b_ref, s_ref, t_ref, o_ref, *, act):
    """Single-K-block matmul with fused (scale, shift, act) epilogue."""
    r = jnp.dot(a_ref[...], b_ref[...], preferred_element_type=jnp.float32)
    r = _apply_act(r * s_ref[...] + t_ref[...], act)
    o_ref[...] = r.astype(o_ref.dtype)


def _mm_res_kernel(a_ref, b_ref, s_ref, t_ref, res_ref, o_ref, *, act):
    """Matmul + (scale, shift, act) + residual add + final ReLU (ResBlock tail)."""
    r = jnp.dot(a_ref[...], b_ref[...], preferred_element_type=jnp.float32)
    r = _apply_act(r * s_ref[...] + t_ref[...], act)
    r = jnp.maximum(r + res_ref[...].astype(jnp.float32), 0.0)
    o_ref[...] = r.astype(o_ref.dtype)


def _mm_w2_kernel(a_ref, b_ref, s_ref, t_ref, w2_ref, s2_ref, t2_ref, o_ref, *, act, act2):
    """Matmul + affine + act, then a second on-tile matmul (fused 1x1 conv) + affine + act."""
    r = jnp.dot(a_ref[...], b_ref[...], preferred_element_type=jnp.float32)
    r = _apply_act(r * s_ref[...] + t_ref[...], act)
    r = jnp.dot(r.astype(w2_ref.dtype), w2_ref[...], preferred_element_type=jnp.float32)
    r = _apply_act(r * s2_ref[...] + t2_ref[...], act2)
    o_ref[...] = r.astype(o_ref.dtype)


def _mm_acc_kernel(a_ref, b_ref, s_ref, t_ref, o_ref, acc_ref, *, act):
    """K-tiled fallback with f32 VMEM accumulator (not exercised by this model)."""
    @pl.when(pl.program_id(2) == 0)
    def _():
        acc_ref[...] = jnp.zeros_like(acc_ref)

    acc_ref[...] += jnp.dot(a_ref[...], b_ref[...], preferred_element_type=jnp.float32)

    @pl.when(pl.program_id(2) == pl.num_programs(2) - 1)
    def _():
        r = _apply_act(acc_ref[...] * s_ref[...] + t_ref[...], act)
        o_ref[...] = r.astype(o_ref.dtype)


def _affine_kernel(x_ref, s_ref, t_ref, o_ref, *, act):
    r = x_ref[...].astype(jnp.float32) * s_ref[...] + t_ref[...]
    o_ref[...] = _apply_act(r, act).astype(o_ref.dtype)


# ----------------------------------------------------------------------------------
# Fused matmul wrapper (bf16 operands, f32 accumulation, lane-dense tiles)
# ----------------------------------------------------------------------------------
def fused_matmul(a, b, scale, shift, *, act=ACT_NONE, w2=None, scale2=None, shift2=None,
                 act2=ACT_NONE, residual=None, out_dtype=jnp.float32):
    """act((a @ b) * scale + shift), optionally followed either by
         + residual, ReLU                       (ResBlock tail fusion), or
         @ w2 * scale2 + shift2, act2           (1x1-conv + BN + act fusion),
    all inside one Pallas kernel.  scale/shift are per output column."""
    M, K = a.shape
    K2, N = b.shape
    assert K == K2
    assert w2 is None or residual is None

    # --- N tiling: full-extent blocks (all layers here have N <= 512) --------------
    if N <= 512:
        tn = N
    else:
        tn = next((c for c in (512, 256) if N % c == 0), 128)
    Np = _round_up(N, tn)
    if w2 is not None:
        assert tn == N and Np == N, "1x1-conv fusion needs the full N in one tile"

    # --- K handling: every matmul in this model fits a single K block in VMEM ------
    tk = K if K % 16 == 0 else _round_up(K, 16)
    single_k = tk <= 2048 or _round_up(M, 16) * tk * 2 <= (4 << 20)
    if not single_k:
        assert w2 is None and residual is None, "K-tiled fallback is plain-epilogue only"
        tk = next((c for c in (512, 256, 384) if K % c == 0), 128)  # prefer 256 multiples
    Kp = _round_up(K, tk)

    # --- M tile: ~8 MiB of A per pipeline buffer, up to 4096 rows -------------------
    cap = (8 << 20) // (tk * 2)
    cap = max(256, min(4096, (cap // 128) * 128))
    if w2 is not None:
        cap = min(cap, 2048)  # keep the on-tile f32 intermediate of the 2nd matmul modest
    nmb = -(-M // cap)
    tm = min(cap, _round_up(-(-M // nmb), 16))
    Mp = _round_up(M, tm)

    # --- operand prep: bf16 matmul operands, f32 epilogue ---------------------------
    a = a.astype(jnp.bfloat16)
    b = b.astype(jnp.bfloat16)
    if Mp != M or Kp != K:
        a = jnp.pad(a, ((0, Mp - M), (0, Kp - K)))
    if Kp != K or Np != N:
        b = jnp.pad(b, ((0, Kp - K), (0, Np - N)))
    scale = scale.reshape(1, N).astype(jnp.float32)
    shift = shift.reshape(1, N).astype(jnp.float32)
    if Np != N:
        scale = jnp.pad(scale, ((0, 0), (0, Np - N)), constant_values=1.0)
        shift = jnp.pad(shift, ((0, 0), (0, Np - N)))

    flops = 2 * M * N * K + (2 * M * N * N if w2 is not None else 0)
    cost = pl.CostEstimate(
        flops=flops,
        transcendentals=M * N if (act == ACT_SIGMOID or act2 == ACT_SIGMOID) else 0,
        bytes_accessed=M * K * 2 + K * N * 2 + M * N * 4)
    cparams = pltpu.CompilerParams(
        dimension_semantics=("parallel", "parallel"),
        vmem_limit_bytes=VMEM_LIMIT)

    if single_k:
        # M is the leading grid axis so the megacore sharder (v7x, 2 TCs) can split it;
        # most layers here have a single N block, so B / scale / shift stay resident
        # while A streams.
        grid = (Mp // tm, Np // tn)
        a_spec = pl.BlockSpec((tm, tk), lambda i, j: (i, 0))
        b_spec = pl.BlockSpec((tk, tn), lambda i, j: (0, j))
        v_spec = pl.BlockSpec((1, tn), lambda i, j: (0, j))
        o_spec = pl.BlockSpec((tm, tn), lambda i, j: (i, j))
        out_shape = jax.ShapeDtypeStruct((Mp, Np), out_dtype)
        if w2 is not None:
            w2 = w2.astype(jnp.bfloat16)
            scale2 = scale2.reshape(1, N).astype(jnp.float32)
            shift2 = shift2.reshape(1, N).astype(jnp.float32)
            out = pl.pallas_call(
                functools.partial(_mm_w2_kernel, act=act, act2=act2),
                out_shape=out_shape,
                grid_spec=pltpu.PrefetchScalarGridSpec(
                    num_scalar_prefetch=0, grid=grid,
                    in_specs=[a_spec, b_spec, v_spec, v_spec,
                              pl.BlockSpec((N, N), lambda i, j: (0, 0)), v_spec, v_spec],
                    out_specs=o_spec),
                compiler_params=cparams, cost_estimate=cost,
            )(a, b, scale, shift, w2, scale2, shift2)
        elif residual is not None:
            residual = residual.astype(jnp.float32)
            if Mp != M or Np != N:
                residual = jnp.pad(residual, ((0, Mp - M), (0, Np - N)))
            out = pl.pallas_call(
                functools.partial(_mm_res_kernel, act=act),
                out_shape=out_shape,
                grid_spec=pltpu.PrefetchScalarGridSpec(
                    num_scalar_prefetch=0, grid=grid,
                    in_specs=[a_spec, b_spec, v_spec, v_spec, o_spec],
                    out_specs=o_spec),
                compiler_params=cparams, cost_estimate=cost,
            )(a, b, scale, shift, residual)
        else:
            out = pl.pallas_call(
                functools.partial(_mm_kernel, act=act),
                out_shape=out_shape,
                grid_spec=pltpu.PrefetchScalarGridSpec(
                    num_scalar_prefetch=0, grid=grid,
                    in_specs=[a_spec, b_spec, v_spec, v_spec],
                    out_specs=o_spec),
                compiler_params=cparams, cost_estimate=cost,
            )(a, b, scale, shift)
    else:
        out = pl.pallas_call(
            functools.partial(_mm_acc_kernel, act=act),
            out_shape=jax.ShapeDtypeStruct((Mp, Np), out_dtype),
            grid_spec=pltpu.PrefetchScalarGridSpec(
                num_scalar_prefetch=0,
                grid=(Mp // tm, Np // tn, Kp // tk),
                in_specs=[
                    pl.BlockSpec((tm, tk), lambda i, j, k: (i, k)),
                    pl.BlockSpec((tk, tn), lambda i, j, k: (k, j)),
                    pl.BlockSpec((1, tn), lambda i, j, k: (0, j)),
                    pl.BlockSpec((1, tn), lambda i, j, k: (0, j)),
                ],
                out_specs=pl.BlockSpec((tm, tn), lambda i, j, k: (i, j)),
                scratch_shapes=[pltpu.VMEM((tm, tn), jnp.float32)]),
            compiler_params=pltpu.CompilerParams(
                dimension_semantics=("parallel", "parallel", "arbitrary"),
                vmem_limit_bytes=VMEM_LIMIT),
            cost_estimate=cost,
        )(a, b, scale, shift)

    if Mp != M or Np != N:
        out = out[:M, :N]
    return out


# ----------------------------------------------------------------------------------
# Per-channel affine + activation (lane-packed, no channel padding when 128 % C == 0)
# ----------------------------------------------------------------------------------
def _affine_2d(x, scale, shift, act):
    R, C = x.shape  # C is a multiple of 128 here
    if R <= 2048:
        tr, Rp = R, R
    else:
        tr = 1024
        Rp = _round_up(R, tr)
        if Rp != R:
            x = jnp.pad(x, ((0, Rp - R), (0, 0)))
    out = pl.pallas_call(
        functools.partial(_affine_kernel, act=act),
        out_shape=jax.ShapeDtypeStruct((Rp, C), jnp.float32),
        grid_spec=pltpu.PrefetchScalarGridSpec(
            num_scalar_prefetch=0,
            grid=(Rp // tr,),
            in_specs=[
                pl.BlockSpec((tr, C), lambda i: (i, 0)),
                pl.BlockSpec((1, C), lambda i: (0, 0)),
                pl.BlockSpec((1, C), lambda i: (0, 0)),
            ],
            out_specs=pl.BlockSpec((tr, C), lambda i: (i, 0)),
        ),
        compiler_params=pltpu.CompilerParams(
            dimension_semantics=("parallel",),
            vmem_limit_bytes=VMEM_LIMIT),
    )(x, scale.reshape(1, C), shift.reshape(1, C))
    return out[:R] if Rp != R else out


def channel_affine_act(x, scale, shift, *, act=ACT_NONE):
    """Elementwise per-channel act(x * scale + shift); x is (rows, channels)."""
    R, C = x.shape
    scale = scale.astype(jnp.float32)
    shift = shift.astype(jnp.float32)
    if C < 128 and 128 % C == 0 and (R * C) % 128 == 0:
        rep = 128 // C  # pack `rep` rows per 128-lane row -> lane-dense, zero padding
        xr = x.reshape(R // rep, 128)
        out = _affine_2d(xr, jnp.tile(scale, rep), jnp.tile(shift, rep), act)
        return out.reshape(R, C)
    Cp = _round_up(C, 128)
    xp = jnp.pad(x.astype(jnp.float32), ((0, 0), (0, Cp - C)))
    sp = jnp.pad(scale, (0, Cp - C), constant_values=1.0)
    tp = jnp.pad(shift, (0, Cp - C))
    return _affine_2d(xp, sp, tp, act)[:, :C]


# ----------------------------------------------------------------------------------
# Layer helpers (glue + Pallas calls)
# ----------------------------------------------------------------------------------
def bn_fold(gamma, beta, mean, var):
    scale = gamma / jnp.sqrt(var + EPS)
    shift = beta - mean * scale
    return scale, shift


def conv2d_bn_act(x, w, b, bn, *, stride, pad, act, residual=None):
    """x: (B,H,W,Cin) channel-last; w: torch layout (Cout,Cin,kh,kw).
    Fused bias + eval-BN + act, and optionally a fused residual-add + final ReLU."""
    Cout, Cin, kh, kw = w.shape
    xp = jnp.pad(x, ((0, 0), (pad, pad), (pad, pad), (0, 0)))
    B, H, W, _ = xp.shape
    Ho = (H - kh) // stride + 1
    Wo = (W - kw) // stride + 1
    cols = []
    for i in range(kh):
        for j in range(kw):
            cols.append(xp[:, i:i + stride * Ho:stride, j:j + stride * Wo:stride, :])
    patches = jnp.stack(cols, axis=3).reshape(B * Ho * Wo, kh * kw * Cin)
    wm = jnp.transpose(w, (2, 3, 1, 0)).reshape(kh * kw * Cin, Cout)
    if bn is None:
        scale = jnp.ones((Cout,), jnp.float32)
        shift = b.astype(jnp.float32)
    else:
        scale, shift = bn_fold(*bn)
        shift = b * scale + shift
    res = None if residual is None else residual.reshape(B * Ho * Wo, Cout)
    out = fused_matmul(patches, wm, scale, shift, act=act, residual=res)
    return out.reshape(B, Ho, Wo, Cout)


def maxpool2d(x, *, k=3, stride=2, pad=1, relu=False):
    xp = jnp.pad(x, ((0, 0), (pad, pad), (pad, pad), (0, 0)), constant_values=-jnp.inf)
    B, H, W, C = xp.shape
    Ho = (H - k) // stride + 1
    Wo = (W - k) // stride + 1
    out = None
    for i in range(k):
        for j in range(k):
            s = xp[:, i:i + stride * Ho:stride, j:j + stride * Wo:stride, :]
            out = s if out is None else jnp.maximum(out, s)
    if relu:
        out = jnp.maximum(out, 0.0)  # folded ReLU (stays inside the same XLA fusion)
    return out


def convt3d_block(x, wt, bt, bn_t, *, pad, act_t, w1=None, b1=None, bn_1=None,
                  out_dtype=jnp.bfloat16):
    """ConvTranspose3d(stride=2, kernel=4) + bias + (eval) BN + activation, optionally
    followed by a FUSED 1x1 Conv3d + BN + ReLU, all in one Pallas matmul.

    Phase decomposition: each of the 8 output parities is an ordinary 2x2x2 conv over
    the 1-padded input, so the layer is a single MXU matmul with K = 8*Cin and
    N = 8*Cout.  The fused 1x1 conv becomes a second on-tile matmul with a
    block-diagonal (8*Cout, 8*Cout) weight.  When 8*Cout < 128 (the final 1-channel
    layer) the matmul is lane-packed with a block-diagonal RHS so output stores are
    128-lane dense.  x: (B,D,H,W,Cin) channel-last; wt: torch layout (Cin,Cout,4,4,4).
    """
    B, D, H, W, Cin = x.shape
    _, Cout, kd, kh, kw = wt.shape
    assert (kd, kh, kw) == (4, 4, 4)

    x = x.astype(jnp.bfloat16)
    xp = jnp.pad(x, ((0, 0), (1, 1), (1, 1), (1, 1), (0, 0)))
    Do, Ho, Wo = D + 1, H + 1, W + 1
    cols = []
    for a in range(2):
        for b2 in range(2):
            for c in range(2):
                cols.append(xp[:, a:a + Do, b2:b2 + Ho, c:c + Wo, :])
    # TODO(synk): this 8-tap im2col still round-trips ~8x the input through HBM; the
    # +1 H/W shifts are not block-aligned so BlockSpec cannot express them and forming
    # the taps in-kernel needs sublane-unaligned relayouts, so it is left to XLA.
    patches = jnp.stack(cols, axis=4).reshape(B * Do * Ho * Wo, 8 * Cin)

    # weight matrix: rows ordered (a_d, a_h, a_w, cin), cols ordered (p_d, p_h, p_w, cout)
    # tap used for phase p at window offset a is  t = p + 2 - 2a
    idx = jnp.array([[2, 3], [0, 1]], dtype=jnp.int32)            # idx[a, p]
    w3 = wt[:, :, idx, :, :][:, :, :, :, idx, :][:, :, :, :, :, :, idx]
    # axes now: (cin, cout, a_d, p_d, a_h, p_h, a_w, p_w)
    wmat = jnp.transpose(w3, (2, 4, 6, 0, 3, 5, 7, 1)).reshape(8 * Cin, 8 * Cout)

    if bn_t is None:
        s1 = jnp.ones((Cout,), jnp.float32)
        t1 = bt.astype(jnp.float32)
    else:
        s1, t1 = bn_fold(*bn_t)
        t1 = bt * s1 + t1
    s1 = jnp.tile(s1, 8)
    t1 = jnp.tile(t1, 8)
    N = 8 * Cout

    if w1 is not None:
        # Fused 1x1 Conv3d + BN + ReLU: the 1x1 conv acts per voxel/phase, so it is a
        # block-diagonal second matmul applied to the (tm, 8*Cout) tile in the epilogue.
        w1m = w1.reshape(w1.shape[0], Cout).T                     # (Cin1==Cout, Cout1)
        w2 = jnp.kron(jnp.eye(8, dtype=w1m.dtype), w1m)           # (8*Cout, 8*Cout)
        s2, t2 = bn_fold(*bn_1)
        t2 = b1 * s2 + t2
        out = fused_matmul(patches, wmat, s1, t1, act=act_t,
                           w2=w2, scale2=jnp.tile(s2, 8), shift2=jnp.tile(t2, 8),
                           act2=ACT_RELU, out_dtype=out_dtype)
    elif N < 128:
        # Lane-pack the tiny-N output: r consecutive rows share one 128-lane output row
        # via a block-diagonal RHS (dense stores, full MXU columns).
        r = 128 // N
        M = patches.shape[0]
        Mr = _round_up(M, r)
        if Mr != M:
            patches = jnp.pad(patches, ((0, Mr - M), (0, 0)))
        packed = patches.reshape(Mr // r, r * 8 * Cin)            # free row-merge reshape
        wblk = jnp.kron(jnp.eye(r, dtype=wmat.dtype), wmat)       # (r*8*Cin, r*N)
        out = fused_matmul(packed, wblk, jnp.tile(s1, r), jnp.tile(t1, r),
                           act=act_t, out_dtype=out_dtype)
        out = out.reshape(Mr, N)[:M]
    else:
        out = fused_matmul(patches, wmat, s1, t1, act=act_t, out_dtype=out_dtype)

    out = out.reshape(B, Do, Ho, Wo, 2, 2, 2, Cout)
    out = jnp.transpose(out, (0, 1, 4, 2, 5, 3, 6, 7)).reshape(B, 2 * Do, 2 * Ho, 2 * Wo, Cout)
    pd_, ph_, pw_ = pad
    return out[:, pd_:2 * Do - pd_, ph_:2 * Ho - ph_, pw_:2 * Wo - pw_, :]


def convt3d_reference(x, wt, bias, pad):
    """Direct (looped) f32 ConvTranspose3d(stride=2, kernel=4) for self-checking."""
    B, D, H, W, Ci = x.shape
    Co = wt.shape[1]
    out = jnp.zeros((B, 2 * D + 2, 2 * H + 2, 2 * W + 2, Co), jnp.float32)
    for a in range(4):
        for b2 in range(4):
            for c in range(4):
                contrib = jnp.einsum('bdhwi,io->bdhwo', x, wt[:, :, a, b2, c])
                out = out.at[:, a:a + 2 * D:2, b2:b2 + 2 * H:2, c:c + 2 * W:2, :].add(contrib)
    out = out + bias
    pd_, ph_, pw_ = pad
    Df, Hf, Wf = 2 * D + 2, 2 * H + 2, 2 * W + 2
    return out[:, pd_:Df - pd_, ph_:Hf - ph_, pw_:Wf - pw_, :]


# ----------------------------------------------------------------------------------
# ResNet (backbone) forward
# ----------------------------------------------------------------------------------
def resblock_forward(x, p):
    if "sc_w" in p:  # downsampling block
        sc = conv2d_bn_act(x, p["sc_w"], p["sc_b"], p["sc_bn"], stride=2, pad=0, act=ACT_NONE)
        stride1 = 2
    else:
        sc = x
        stride1 = 1
    h = conv2d_bn_act(x, p["w1"], p["b1"], p["bn1"], stride=stride1, pad=1, act=ACT_RELU)
    # conv2 + BN + ReLU, then residual add + final ReLU, fused into one kernel epilogue
    return conv2d_bn_act(h, p["w2"], p["b2"], p["bn2"], stride=1, pad=1, act=ACT_RELU,
                         residual=sc)


def resnet_forward(image, P):
    # image: (B, 1, H, W) NCHW -> channel-last
    x = jnp.transpose(image, (0, 2, 3, 1))
    # layer0: Conv2d(1,64,7,s2,p3) -> MaxPool(3,s2,p1) -> BN -> ReLU.  The eval-mode BN
    # is folded into the conv epilogue (its per-channel scale is positive, so it
    # commutes with the max) and the ReLU is folded into the maxpool.
    x = conv2d_bn_act(x, P["l0_w"], P["l0_b"], P["l0_bn"], stride=2, pad=3, act=ACT_NONE)
    x = maxpool2d(x, k=3, stride=2, pad=1, relu=True)
    for layer in P["layers"]:
        for blk in layer:
            x = resblock_forward(x, blk)
    # AdaptiveAvgPool2d(1) + flatten
    return jnp.mean(x, axis=(1, 2))  # (B, 512)


# ----------------------------------------------------------------------------------
# grid_sample + voxel gather (plain-JAX glue: data-dependent gathers)
# ----------------------------------------------------------------------------------
def grid_sample_3d(vol, grid):
    """Trilinear, align_corners=False, padding_mode='zeros'.
    vol: (B, D, H, W); grid: (B, Do, Ho, Wo, 3) with last dim = (x->W, y->H, z->D)."""
    B, D, H, W = vol.shape
    gx, gy, gz = grid[..., 0], grid[..., 1], grid[..., 2]
    ix = ((gx + 1.0) * W - 1.0) * 0.5
    iy = ((gy + 1.0) * H - 1.0) * 0.5
    iz = ((gz + 1.0) * D - 1.0) * 0.5
    x0, y0, z0 = jnp.floor(ix), jnp.floor(iy), jnp.floor(iz)
    x1, y1, z1 = x0 + 1, y0 + 1, z0 + 1
    wx1, wy1, wz1 = ix - x0, iy - y0, iz - z0
    wx0, wy0, wz0 = 1 - wx1, 1 - wy1, 1 - wz1
    bidx = jnp.arange(B).reshape(B, 1, 1, 1)

    def gather(xi, yi, zi):
        inb = (xi >= 0) & (xi <= W - 1) & (yi >= 0) & (yi <= H - 1) & (zi >= 0) & (zi <= D - 1)
        xc = jnp.clip(xi, 0, W - 1).astype(jnp.int32)
        yc = jnp.clip(yi, 0, H - 1).astype(jnp.int32)
        zc = jnp.clip(zi, 0, D - 1).astype(jnp.int32)
        return jnp.where(inb, vol[bidx, zc, yc, xc], 0.0)

    return (gather(x0, y0, z0) * wx0 * wy0 * wz0 + gather(x1, y0, z0) * wx1 * wy0 * wz0 +
            gather(x0, y1, z0) * wx0 * wy1 * wz0 + gather(x1, y1, z0) * wx1 * wy1 * wz0 +
            gather(x0, y0, z1) * wx0 * wy0 * wz1 + gather(x1, y0, z1) * wx1 * wy0 * wz1 +
            gather(x0, y1, z1) * wx0 * wy1 * wz1 + gather(x1, y1, z1) * wx1 * wy1 * wz1)


def voxel_lookup(ys, x_coords, *, bound):
    """ys: (B, Dy, Hy, Wy) sampled volume; x_coords: (B, N, >=3).  Mirrors the per-batch
    bounds-checked gather + (1-p, p) concat of the reference forward (note: as in the
    reference, only x and y are range-checked against `bound`; z is only clipped)."""
    B = x_coords.shape[0]
    xv = x_coords.reshape(B, -1, x_coords.shape[-1])[:, :, 0:3]
    vx, vy, vz = xv[..., 0], xv[..., 1], xv[..., 2]
    inside = (vx >= 0) & (vx < bound) & (vy >= 0) & (vy < bound)
    ix = jnp.clip(vx.astype(jnp.int32), 0, ys.shape[1] - 1)
    iy = jnp.clip(vy.astype(jnp.int32), 0, ys.shape[2] - 1)
    iz = jnp.clip(vz.astype(jnp.int32), 0, ys.shape[3] - 1)
    bidx = jnp.arange(B).reshape(B, 1)
    gathered = ys[bidx, ix, iy, iz]
    y_pred = jnp.where(inside, gathered, 0.0).reshape(-1, 1)
    return jnp.concatenate([1.0 - y_pred, y_pred], axis=1)


# ----------------------------------------------------------------------------------
# Net_upsampling forward (run the whole thing under a single jax.jit)
# ----------------------------------------------------------------------------------
def net_upsampling_forward(params, x, image):
    P = params
    B = image.shape[0]
    y = resnet_forward(image, P["resnet"])                       # (B, 512)
    y = y.reshape(B, 8, 4, 4, 4)                                 # == torch .view(B,8,4,4,4)
    y = jnp.transpose(y, (0, 2, 3, 4, 1))                        # channel-last (B,D,H,W,C)

    # bn0 + relu
    s0, t0 = bn_fold(*P["bn0"])
    y = channel_affine_act(y.reshape(-1, 8), s0, t0, act=ACT_RELU).reshape(B, 4, 4, 4, 8)

    # ConvTranspose3d + bias + BN + ReLU, with the following 1x1 Conv3d + BN + ReLU fused
    # into the same Pallas matmul; bf16 intermediates, f32 accumulation.
    y = convt3d_block(y, P["ct1_w"], P["ct1_b"], P["bn1"], pad=(0, 0, 0), act_t=ACT_RELU,
                      w1=P["c1_w"], b1=P["c1_b"], bn_1=P["bn_c1"], out_dtype=jnp.bfloat16)
    y = convt3d_block(y, P["ct2_w"], P["ct2_b"], P["bn2"], pad=(0, 0, 2), act_t=ACT_RELU,
                      w1=P["c2_w"], b1=P["c2_b"], bn_1=P["bn_c2"], out_dtype=jnp.bfloat16)
    y = convt3d_block(y, P["ct3_w"], P["ct3_b"], P["bn3"], pad=(0, 0, 2), act_t=ACT_RELU,
                      w1=P["c3_w"], b1=P["c3_b"], bn_1=P["bn_c3"], out_dtype=jnp.bfloat16)

    # final ConvTranspose3d + bias + sigmoid; lane-packed (N=8 -> 128) f32 output
    y = convt3d_block(y, P["ct4_w"], P["ct4_b"], None, pad=(0, 0, 2), act_t=ACT_SIGMOID,
                      out_dtype=jnp.float32)
    y = y[..., 0]                                                # (B, 94, 94, 66)

    # TODO(synk): meshx/meshy/meshz are undefined module-level globals in the reference;
    # synthesized here as a (W_BOUND^3) trilinear resampling grid spanning [-1, 1].
    lin = jnp.linspace(-1.0, 1.0, W_BOUND)
    meshx, meshy, meshz = jnp.meshgrid(lin, lin, lin, indexing="ij")
    grid = jnp.stack((meshx, meshy, meshz), axis=3)
    grid = jnp.broadcast_to(grid[None], (B, W_BOUND, W_BOUND, W_BOUND, 3))

    ys = grid_sample_3d(y, grid)                                 # (B, W_BOUND^3)
    # TODO(synk): only the batched (x.dim() != 3) branch of the reference is implemented.
    return voxel_lookup(ys, x, bound=W_BOUND)


# ----------------------------------------------------------------------------------
# Deterministic parameter init (shapes mirror the PyTorch module; BN in eval mode)
# ----------------------------------------------------------------------------------
def init_params(key):
    state = [key]

    def nxt():
        state[0], sub = jax.random.split(state[0])
        return sub

    def conv_w(shape, fan_in):
        return (jax.random.normal(nxt(), shape, jnp.float32) * jnp.sqrt(2.0 / fan_in))

    def bias(n):
        return jax.random.normal(nxt(), (n,), jnp.float32) * 0.01

    def bn(n):  # (gamma, beta, running_mean, running_var) — PyTorch defaults
        return (jnp.ones((n,), jnp.float32), jnp.zeros((n,), jnp.float32),
                jnp.zeros((n,), jnp.float32), jnp.ones((n,), jnp.float32))

    R = {"l0_w": conv_w((64, 1, 7, 7), 49), "l0_b": bias(64), "l0_bn": bn(64)}
    filters = [64, 64, 128, 256, 512]
    repeat = [3, 4, 6, 3]
    layers = []
    for li in range(4):
        blocks = []
        for bi in range(repeat[li]):
            ds = (li > 0) and (bi == 0)
            cin = filters[li] if bi == 0 else filters[li + 1]
            cout = filters[li + 1]
            blk = {
                "w1": conv_w((cout, cin, 3, 3), cin * 9), "b1": bias(cout), "bn1": bn(cout),
                "w2": conv_w((cout, cout, 3, 3), cout * 9), "b2": bias(cout), "bn2": bn(cout),
            }
            if ds:  # presence of sc_* keys marks a downsampling block (static structure)
                blk["sc_w"] = conv_w((cout, cin, 1, 1), cin)
                blk["sc_b"] = bias(cout)
                blk["sc_bn"] = bn(cout)
            blocks.append(blk)
        layers.append(blocks)
    R["layers"] = layers

    P = {"resnet": R, "bn0": bn(8)}
    P["ct1_w"] = conv_w((8, 64, 4, 4, 4), 8 * 64);   P["ct1_b"] = bias(64);  P["bn1"] = bn(64)
    P["c1_w"] = conv_w((64, 64, 1, 1, 1), 64);       P["c1_b"] = bias(64);   P["bn_c1"] = bn(64)
    P["ct2_w"] = conv_w((64, 32, 4, 4, 4), 64 * 64); P["ct2_b"] = bias(32);  P["bn2"] = bn(32)
    P["c2_w"] = conv_w((32, 32, 1, 1, 1), 32);       P["c2_b"] = bias(32);   P["bn_c2"] = bn(32)
    P["ct3_w"] = conv_w((32, 16, 4, 4, 4), 32 * 64); P["ct3_b"] = bias(16);  P["bn3"] = bn(16)
    P["c3_w"] = conv_w((16, 16, 1, 1, 1), 16);       P["c3_b"] = bias(16);   P["bn_c3"] = bn(16)
    P["ct4_w"] = conv_w((16, 1, 4, 4, 4), 16 * 64);  P["ct4_b"] = bias(1)
    return P


# ----------------------------------------------------------------------------------
if __name__ == "__main__":
    key = jax.random.PRNGKey(0)
    pkey, ikey, kx, ky, kz, kw_, kc = jax.random.split(key, 7)

    # --- one-time numerical check of the ConvTranspose3d phase decomposition ---------
    c0, c1, c2 = jax.random.split(kc, 3)
    xs = jax.random.normal(c0, (1, 3, 4, 5, 16), jnp.float32)
    ws = jax.random.normal(c1, (16, 1, 4, 4, 4), jnp.float32) * 0.1
    bs = jax.random.normal(c2, (1,), jnp.float32) * 0.1
    got = convt3d_block(xs, ws, bs, None, pad=(0, 0, 2), act_t=ACT_NONE,
                        out_dtype=jnp.float32)                       # lane-packed path
    ref = convt3d_reference(xs, ws, bs, (0, 0, 2))
    tol = 0.05 * (float(jnp.max(jnp.abs(ref))) + 1.0)
    assert float(jnp.max(jnp.abs(got - ref))) <= tol, "convT lane-packed path mismatch"

    xs2 = jax.random.normal(c0, (1, 3, 3, 3, 4), jnp.float32)
    ws2 = jax.random.normal(c1, (4, 16, 4, 4, 4), jnp.float32) * 0.1
    bs2 = jax.random.normal(c2, (16,), jnp.float32) * 0.1
    got2 = convt3d_block(xs2, ws2, bs2, None, pad=(0, 0, 0), act_t=ACT_NONE,
                         out_dtype=jnp.float32)                      # plain (N>=128) path
    ref2 = convt3d_reference(xs2, ws2, bs2, (0, 0, 0))
    tol2 = 0.05 * (float(jnp.max(jnp.abs(ref2))) + 1.0)
    assert float(jnp.max(jnp.abs(got2 - ref2))) <= tol2, "convT plain path mismatch"

    # --- full forward -----------------------------------------------------------------
    params = init_params(pkey)

    B, Nvox = 2, 64
    image = jax.random.normal(ikey, (B, 1, 32, 32), jnp.float32)   # NCHW, 1 channel
    # voxel coordinates: (B, N, 4); cols 0..2 are (x, y, z) indices into the sampled volume
    vx = jax.random.uniform(kx, (B, Nvox, 1), minval=-2.0, maxval=W_BOUND + 2.0)
    vy = jax.random.uniform(ky, (B, Nvox, 1), minval=-2.0, maxval=W_BOUND + 2.0)
    vz = jax.random.uniform(kz, (B, Nvox, 1), minval=0.0, maxval=W_BOUND - 1e-3)
    extra = jax.random.uniform(kw_, (B, Nvox, 1))
    x = jnp.concatenate([vx, vy, vz, extra], axis=-1).astype(jnp.float32)

    forward = jax.jit(net_upsampling_forward)
    out = jax.block_until_ready(forward(params, x, image))
    assert out.shape == (B * Nvox, 2), out.shape
    assert bool(jnp.all(jnp.isfinite(out)))
    print("KERNEL_OK")
</pallas_src>

<mosaic_0001>
module attributes {stable_mosaic.version = 11 : i64} {
  func.func @_mm_kernel(%arg0: i32, %arg1: i32, %arg2: memref<16x2048xbf16, #tpu.memory_space<vmem>>, %arg3: memref<2048x128xbf16, #tpu.memory_space<vmem>>, %arg4: memref<1x128xf32, #tpu.memory_space<vmem>>, %arg5: memref<1x128xf32, #tpu.memory_space<vmem>>, %arg6: memref<16x128xf32, #tpu.memory_space<vmem>>) attributes {dimension_semantics = [#tpu.dimension_semantics<parallel>, #tpu.dimension_semantics<parallel>], iteration_bounds = array<i64: 1, 1>, scalar_prefetch = 0 : i64, scratch_operands = 0 : i64, tpu.core_type = #tpu.core_type<tc>, window_params = [{transform_indices = @transform_0, window_bounds = array<i64: 16, 2048>}, {transform_indices = @transform_1, window_bounds = array<i64: 2048, 128>}, {transform_indices = @transform_2, window_bounds = array<i64: 1, 128>}, {transform_indices = @transform_3, window_bounds = array<i64: 1, 128>}, {transform_indices = @transform_4, window_bounds = array<i64: 16, 128>}]} {
    %c0 = arith.constant 0 : index
    %c0_0 = arith.constant 0 : index
    %0 = vector.load %arg2[%c0, %c0_0] : memref<16x2048xbf16, #tpu.memory_space<vmem>>, vector<16x2048xbf16>
    %c0_1 = arith.constant 0 : index
    %c0_2 = arith.constant 0 : index
    %1 = vector.load %arg3[%c0_1, %c0_2] : memref<2048x128xbf16, #tpu.memory_space<vmem>>, vector<2048x128xbf16>
    %cst = arith.constant dense<0.000000e+00> : vector<16x128xf32>
    %2 = tpu.matmul %0, %1, %cst {dimension_numbers = #tpu.dot_dimension_numbers<[1], [0], [0], [1], [0, 0, 1, 1], [], []>} : vector<16x2048xbf16>, vector<2048x128xbf16>, vector<16x128xf32> -> vector<16x128xf32>
    %c0_3 = arith.constant 0 : index
    %c0_4 = arith.constant 0 : index
    %3 = vector.load %arg4[%c0_3, %c0_4] : memref<1x128xf32, #tpu.memory_space<vmem>>, vector<1x128xf32>
    %4 = vector.broadcast %3 : vector<1x128xf32> to vector<16x128xf32>
    %5 = arith.mulf %2, %4 : vector<16x128xf32>
    %c0_5 = arith.constant 0 : index
    %c0_6 = arith.constant 0 : index
    %6 = vector.load %arg5[%c0_5, %c0_6] : memref<1x128xf32, #tpu.memory_space<vmem>>, vector<1x128xf32>
    %7 = vector.broadcast %6 : vector<1x128xf32> to vector<16x128xf32>
    %8 = arith.addf %5, %7 : vector<16x128xf32>
    %c0_7 = arith.constant 0 : index
    %c0_8 = arith.constant 0 : index
    %9 = vector.load %arg6[%c0_7, %c0_8] : memref<16x128xf32, #tpu.memory_space<vmem>>, vector<16x128xf32>
    tpu.vector_store %arg6[%c0_7, %c0_8], %8 {strides = array<i32>} : memref<16x128xf32, #tpu.memory_space<vmem>>, vector<16x128xf32>,
    return
  }
  func.func @transform_0(%arg0: i32, %arg1: i32) -> (i32, i32) {
    %c0_i32 = arith.constant 0 : i32
    %c0_i32_0 = arith.constant 0 : i32
    return %arg0, %c0_i32 : i32, i32
  }
  func.func @transform_1(%arg0: i32, %arg1: i32) -> (i32, i32) {
    %c0_i32 = arith.constant 0 : i32
    %c0_i32_0 = arith.constant 0 : i32
    return %c0_i32, %arg1 : i32, i32
  }
  func.func @transform_2(%arg0: i32, %arg1: i32) -> (i32, i32) {
    %c0_i32 = arith.constant 0 : i32
    %c0_i32_0 = arith.constant 0 : i32
    return %c0_i32, %arg1 : i32, i32
  }
  func.func @transform_3(%arg0: i32, %arg1: i32) -> (i32, i32) {
    %c0_i32 = arith.constant 0 : i32
    %c0_i32_0 = arith.constant 0 : i32
    return %c0_i32, %arg1 : i32, i32
  }
  func.func @transform_4(%arg0: i32, %arg1: i32) -> (i32, i32) {
    %c0_i32 = arith.constant 0 : i32
    return %arg0, %arg1 : i32, i32
  }
}

</mosaic_0001>

<llo_original>
// kernel: tpu_custom_call.1
$region0: #{tpu_custom_call.1}
  #allocation0 [shape = 'u32[]', space=smem, size = 0x4, offset = 0x4, fixed_abs, tag = 'smem constant byte address 0x4 - core index']
  #allocation1 [shape = 'u32[144,128]{1,0:T(1,128)}', space=vmem, size = 0x12000, scoped, tag = 'internal scratch']
  %s0 = inlined_call_operand.hbm [shape: bf16[16,2048], index: 0, kind: input, shape index: {}]
  %s1 = inlined_call_operand.hbm [shape: bf16[2048,128], index: 1, kind: input, shape index: {}]
  %s2 = inlined_call_operand.vmem [shape: f32[1,128], index: 2, kind: input, shape index: {}]
  %s3 = inlined_call_operand.vmem [shape: f32[1,128], index: 3, kind: input, shape index: {}]
  %s4 = inlined_call_operand.hbm [shape: f32[16,128], index: 4, kind: output, shape index: {}]
  %s5 = sld [smem:[#allocation0]]
  $region34: #{tpu_custom_call.1} parent=0
    _
  %s7 = ssub.s32 1, %s5
  %s8 = scalar_select 0, %s7, %s5
  $region1: #{tpu_custom_call.1} parent=0
    #allocation2 [shape = 'u8[65536]{0}', space=vmem, size = 0x10000, scoped, tag = 'input window, operand 0, single buffered']
    #allocation3 [shape = 's32[1]{0}', space=sflag, size = 0x4, scoped, tag = 'scoped memory for tpu_custom_call.1']
    #allocation4 [shape = 's32[1]{0}', space=sflag, size = 0x4, scoped, tag = 'scoped memory for tpu_custom_call.1']
    #allocation5 [shape = 'u8[524288]{0}', space=vmem, size = 0x80000, scoped, tag = 'input window, operand 1, single buffered']
    #allocation6 [shape = 's32[1]{0}', space=sflag, size = 0x4, scoped, tag = 'scoped memory for tpu_custom_call.1']
    #allocation7 [shape = 'u8[8192]{0}', space=vmem, size = 0x2000, scoped, tag = 'output window, operand 0, single buffered']
    %9 = vsyncpa [#allocation3], 0
    %10 = vsyncpa [#allocation6], 0
    %11 = vsyncpa [#allocation4], 0
    // Predicated region
    $region2: #{tpu_custom_call.1} parent=1 // pred_check
      _
    $region3: #{tpu_custom_call.1} parent=1 // pred_check_branch
      %13 = sbr.rel (0) target = $region5
    $region4: #{tpu_custom_call.1} parent=1 // pred_region
      %s15 = ssub.s32 2048, 2048
      %16 = vsyncadd [#allocation3], %s15
      %s17 = sshll.u32 [#allocation2], 4
      %s18 = int_to_ptr.vmem [resolvable:$true] %s17
      %23 = dma.hbm_to_vmem [thread:$0]  %s0, 2048, %s18, [#allocation3], 1024, 1024, 64
    $region5: #{tpu_custom_call.1} parent=1 // pred_fallthru
      _
    // Predicated region
    $region6: #{tpu_custom_call.1} parent=1 // pred_check
      _
    $region7: #{tpu_custom_call.1} parent=1 // pred_check_branch
      %25 = sbr.rel (0) target = $region9
    $region8: #{tpu_custom_call.1} parent=1 // pred_region
      %s27 = ssub.s32 16384, 16384
      %28 = vsyncadd [#allocation6], %s27
      %s29 = sshll.u32 [#allocation5], 4
      %s30 = int_to_ptr.vmem [resolvable:$true] %s29
      %35 = dma.hbm_to_vmem [thread:$0]  %s1, 16384, %s30, [#allocation6], 64, 64, 4
    $region9: #{tpu_custom_call.1} parent=1 // pred_fallthru
      _
    // Predicated region
    $region10: #{tpu_custom_call.1} parent=1 // pred_check
      _
    $region11: #{tpu_custom_call.1} parent=1 // pred_check_branch
      %37 = sbr.rel (0) target = $region13
    $region12: #{tpu_custom_call.1} parent=1 // pred_region
      _
    $region13: #{tpu_custom_call.1} parent=1 // pred_fallthru
      _
    // Predicated region
    $region14: #{tpu_custom_call.1} parent=1 // pred_check
      _
    $region15: #{tpu_custom_call.1} parent=1 // pred_check_branch
      %39 = sbr.rel (0) target = $region17
    $region16: #{tpu_custom_call.1} parent=1 // pred_region
      _
    $region17: #{tpu_custom_call.1} parent=1 // pred_fallthru
      _
    // Predicated region
    $region18: #{tpu_custom_call.1} parent=1 // pred_check
      _
    $region19: #{tpu_custom_call.1} parent=1 // pred_check_branch
      %41 = sbr.rel (0) target = $region21
    $region20: #{tpu_custom_call.1} parent=1 // pred_region
      %42 = dma.done [#allocation3], 2048
    $region21: #{tpu_custom_call.1} parent=1 // pred_fallthru
      _
    // Predicated region
    $region22: #{tpu_custom_call.1} parent=1 // pred_check
      _
    $region23: #{tpu_custom_call.1} parent=1 // pred_check_branch
      %44 = sbr.rel (0) target = $region25
    $region24: #{tpu_custom_call.1} parent=1 // pred_region
      %45 = dma.done [#allocation6], 16384
    $region25: #{tpu_custom_call.1} parent=1 // pred_fallthru
      _
    %v47 = vld [vmem:[#allocation2] sm:$0xff]
    %v48 = vld [vmem:[#allocation2 + $0x8] sm:$0xff]
    %v49 = vld [vmem:[#allocation2 + $0x10] sm:$0xff]
    %v50 = vld [vmem:[#allocation2 + $0x18] sm:$0xff]
    %v51 = vld [vmem:[#allocation2 + $0x20] sm:$0xff]
    %v52 = vld [vmem:[#allocation2 + $0x28] sm:$0xff]
    %v53 = vld [vmem:[#allocation2 + $0x30] sm:$0xff]
    %v54 = vld [vmem:[#allocation2 + $0x38] sm:$0xff]
    %v55 = vld [vmem:[#allocation2 + $0x40] sm:$0xff]
    %v56 = vld [vmem:[#allocation2 + $0x48] sm:$0xff]
    %v57 = vld [vmem:[#allocation2 + $0x50] sm:$0xff]
    %v58 = vld [vmem:[#allocation2 + $0x58] sm:$0xff]
    %v59 = vld [vmem:[#allocation2 + $0x60] sm:$0xff]
    %v60 = vld [vmem:[#allocation2 + $0x68] sm:$0xff]
    %v61 = vld [vmem:[#allocation2 + $0x70] sm:$0xff]
    %v62 = vld [vmem:[#allocation2 + $0x78] sm:$0xff]
    %v63 = vld [vmem:[#allocation5] sm:$0xf]
    %v64 = vld [vmem:[#allocation5 + $0x4] sm:$0xf]
    %v65 = vld [vmem:[#allocation5 + $0x8] sm:$0xf]
    %v66 = vld [vmem:[#allocation5 + $0xc] sm:$0xf]
    %v67 = vld [vmem:[#allocation5 + $0x10] sm:$0xf]
    %v68 = vld [vmem:[#allocation5 + $0x14] sm:$0xf]
    %v69 = vld [vmem:[#allocation5 + $0x18] sm:$0xf]
    %v70 = vld [vmem:[#allocation5 + $0x1c] sm:$0xf]
    %v71 = vld [vmem:[#allocation5 + $0x20] sm:$0xf]
    %v72 = vld [vmem:[#allocation5 + $0x24] sm:$0xf]
    %v73 = vld [vmem:[#allocation5 + $0x28] sm:$0xf]
    %v74 = vld [vmem:[#allocation5 + $0x2c] sm:$0xf]
    %v75 = vld [vmem:[#allocation5 + $0x30] sm:$0xf]
    %v76 = vld [vmem:[#allocation5 + $0x34] sm:$0xf]
    %v77 = vld [vmem:[#allocation5 + $0x38] sm:$0xf]
    %v78 = vld [vmem:[#allocation5 + $0x3c] sm:$0xf]
    %v79 = vld [vmem:[#allocation5 + $0x40] sm:$0xf]
    %v80 = vld [vmem:[#allocation5 + $0x44] sm:$0xf]
    %v81 = vld [vmem:[#allocation5 + $0x48] sm:$0xf]
    %v82 = vld [vmem:[#allocation5 + $0x4c] sm:$0xf]
    %v83 = vld [vmem:[#allocation5 + $0x50] sm:$0xf]
    %v84 = vld [vmem:[#allocation5 + $0x54] sm:$0xf]
    %v85 = vld [vmem:[#allocation5 + $0x58] sm:$0xf]
    %v86 = vld [vmem:[#allocation5 + $0x5c] sm:$0xf]
    %v87 = vld [vmem:[#allocation5 + $0x60] sm:$0xf]
    %v88 = vld [vmem:[#allocation5 + $0x64] sm:$0xf]
    %v89 = vld [vmem:[#allocation5 + $0x68] sm:$0xf]
    %v90 = vld [vmem:[#allocation5 + $0x6c] sm:$0xf]
    %v91 = vld [vmem:[#allocation5 + $0x70] sm:$0xf]
    %v92 = vld [vmem:[#allocation5 + $0x74] sm:$0xf]
    %v93 = vld [vmem:[#allocation5 + $0x78] sm:$0xf]
    %v94 = vld [vmem:[#allocation5 + $0x7c] sm:$0xf]
    %v95 = vld [vmem:[#allocation5 + $0x80] sm:$0xf]
    %v96 = vld [vmem:[#allocation5 + $0x84] sm:$0xf]
    %v97 = vld [vmem:[#allocation5 + $0x88] sm:$0xf]
    %v98 = vld [vmem:[#allocation5 + $0x8c] sm:$0xf]
    %v99 = vld [vmem:[#allocation5 + $0x90] sm:$0xf]
    %v100 = vld [vmem:[#allocation5 + $0x94] sm:$0xf]
    %v101 = vld [vmem:[#allocation5 + $0x98] sm:$0xf]
    %v102 = vld [vmem:[#allocation5 + $0x9c] sm:$0xf]
    %v103 = vld [vmem:[#allocation5 + $0xa0] sm:$0xf]
    %v104 = vld [vmem:[#allocation5 + $0xa4] sm:$0xf]
    %v105 = vld [vmem:[#allocation5 + $0xa8] sm:$0xf]
    %v106 = vld [vmem:[#allocation5 + $0xac] sm:$0xf]
    %v107 = vld [vmem:[#allocation5 + $0xb0] sm:$0xf]
    %v108 = vld [vmem:[#allocation5 + $0xb4] sm:$0xf]
    %v109 = vld [vmem:[#allocation5 + $0xb8] sm:$0xf]
    %v110 = vld [vmem:[#allocation5 + $0xbc] sm:$0xf]
    %v111 = vld [vmem:[#allocation5 + $0xc0] sm:$0xf]
    %v112 = vld [vmem:[#allocation5 + $0xc4] sm:$0xf]
    %v113 = vld [vmem:[#allocation5 + $0xc8] sm:$0xf]
    %v114 = vld [vmem:[#allocation5 + $0xcc] sm:$0xf]
    %v115 = vld [vmem:[#allocation5 + $0xd0] sm:$0xf]
    %v116 = vld [vmem:[#allocation5 + $0xd4] sm:$0xf]
    %v117 = vld [vmem:[#allocation5 + $0xd8] sm:$0xf]
    %v118 = vld [vmem:[#allocation5 + $0xdc] sm:$0xf]
    %v119 = vld [vmem:[#allocation5 + $0xe0] sm:$0xf]
    %v120 = vld [vmem:[#allocation5 + $0xe4] sm:$0xf]
    %v121 = vld [vmem:[#allocation5 + $0xe8] sm:$0xf]
    %v122 = vld [vmem:[#allocation5 + $0xec] sm:$0xf]
    %v123 = vld [vmem:[#allocation5 + $0xf0] sm:$0xf]
    %v124 = vld [vmem:[#allocation5 + $0xf4] sm:$0xf]
    %v125 = vld [vmem:[#allocation5 + $0xf8] sm:$0xf]
    %v126 = vld [vmem:[#allocation5 + $0xfc] sm:$0xf]
    %v127 = vld [vmem:[#allocation5 + $0x100] sm:$0xf]
    %v128 = vld [vmem:[#allocation5 + $0x104] sm:$0xf]
    %v129 = vld [vmem:[#allocation5 + $0x108] sm:$0xf]
    %v130 = vld [vmem:[#allocation5 + $0x10c] sm:$0xf]
    %v131 = vld [vmem:[#allocation5 + $0x110] sm:$0xf]
    %v132 = vld [vmem:[#allocation5 + $0x114] sm:$0xf]
    %v133 = vld [vmem:[#allocation5 + $0x118] sm:$0xf]
    %v134 = vld [vmem:[#allocation5 + $0x11c] sm:$0xf]
    %v135 = vld [vmem:[#allocation5 + $0x120] sm:$0xf]
    %v136 = vld [vmem:[#allocation5 + $0x124] sm:$0xf]
    %v137 = vld [vmem:[#allocation5 + $0x128] sm:$0xf]
    %v138 = vld [vmem:[#allocation5 + $0x12c] sm:$0xf]
    %v139 = vld [vmem:[#allocation5 + $0x130] sm:$0xf]
    %v140 = vld [vmem:[#allocation5 + $0x134] sm:$0xf]
    %v141 = vld [vmem:[#allocation5 + $0x138] sm:$0xf]
    %v142 = vld [vmem:[#allocation5 + $0x13c] sm:$0xf]
    %v143 = vld [vmem:[#allocation5 + $0x140] sm:$0xf]
    %v144 = vld [vmem:[#allocation5 + $0x144] sm:$0xf]
    %v145 = vld [vmem:[#allocation5 + $0x148] sm:$0xf]
    %v146 = vld [vmem:[#allocation5 + $0x14c] sm:$0xf]
    %v147 = vld [vmem:[#allocation5 + $0x150] sm:$0xf]
    %v148 = vld [vmem:[#allocation5 + $0x154] sm:$0xf]
    %v149 = vld [vmem:[#allocation5 + $0x158] sm:$0xf]
    %v150 = vld [vmem:[#allocation5 + $0x15c] sm:$0xf]
    %v151 = vld [vmem:[#allocation5 + $0x160] sm:$0xf]
    %v152 = vld [vmem:[#allocation5 + $0x164] sm:$0xf]
    %v153 = vld [vmem:[#allocation5 + $0x168] sm:$0xf]
    %v154 = vld [vmem:[#allocation5 + $0x16c] sm:$0xf]
    %v155 = vld [vmem:[#allocation5 + $0x170] sm:$0xf]
    %v156 = vld [vmem:[#allocation5 + $0x174] sm:$0xf]
    %v157 = vld [vmem:[#allocation5 + $0x178] sm:$0xf]
    %v158 = vld [vmem:[#allocation5 + $0x17c] sm:$0xf]
    %v159 = vld [vmem:[#allocation5 + $0x180] sm:$0xf]
    %v160 = vld [vmem:[#allocation5 + $0x184] sm:$0xf]
    %v161 = vld [vmem:[#allocation5 + $0x188] sm:$0xf]
    %v162 = vld [vmem:[#allocation5 + $0x18c] sm:$0xf]
    %v163 = vld [vmem:[#allocation5 + $0x190] sm:$0xf]
    %v164 = vld [vmem:[#allocation5 + $0x194] sm:$0xf]
    %v165 = vld [vmem:[#allocation5 + $0x198] sm:$0xf]
    %v166 = vld [vmem:[#allocation5 + $0x19c] sm:$0xf]
    %v167 = vld [vmem:[#allocation5 + $0x1a0] sm:$0xf]
    %v168 = vld [vmem:[#allocation5 + $0x1a4] sm:$0xf]
    %v169 = vld [vmem:[#allocation5 + $0x1a8] sm:$0xf]
    %v170 = vld [vmem:[#allocation5 + $0x1ac] sm:$0xf]
    %v171 = vld [vmem:[#allocation5 + $0x1b0] sm:$0xf]
    %v172 = vld [vmem:[#allocation5 + $0x1b4] sm:$0xf]
    %v173 = vld [vmem:[#allocation5 + $0x1b8] sm:$0xf]
    %v174 = vld [vmem:[#allocation5 + $0x1bc] sm:$0xf]
    %v175 = vld [vmem:[#allocation5 + $0x1c0] sm:$0xf]
    %v176 = vld [vmem:[#allocation5 + $0x1c4] sm:$0xf]
    %v177 = vld [vmem:[#allocation5 + $0x1c8] sm:$0xf]
    %v178 = vld [vmem:[#allocation5 + $0x1cc] sm:$0xf]
    %v179 = vld [vmem:[#allocation5 + $0x1d0] sm:$0xf]
    %v180 = vld [vmem:[#allocation5 + $0x1d4] sm:$0xf]
    %v181 = vld [vmem:[#allocation5 + $0x1d8] sm:$0xf]
    %v182 = vld [vmem:[#allocation5 + $0x1dc] sm:$0xf]
    %v183 = vld [vmem:[#allocation5 + $0x1e0] sm:$0xf]
    %v184 = vld [vmem:[#allocation5 + $0x1e4] sm:$0xf]
    %v185 = vld [vmem:[#allocation5 + $0x1e8] sm:$0xf]
    %v186 = vld [vmem:[#allocation5 + $0x1ec] sm:$0xf]
    %v187 = vld [vmem:[#allocation5 + $0x1f0] sm:$0xf]
    %v188 = vld [vmem:[#allocation5 + $0x1f4] sm:$0xf]
    %v189 = vld [vmem:[#allocation5 + $0x1f8] sm:$0xf]
    %v190 = vld [vmem:[#allocation5 + $0x1fc] sm:$0xf]
    %v191 = vld [vmem:[#allocation5 + $0x200] sm:$0xf]
    %v192 = vld [vmem:[#allocation5 + $0x204] sm:$0xf]
    %v193 = vld [vmem:[#allocation5 + $0x208] sm:$0xf]
    %v194 = vld [vmem:[#allocation5 + $0x20c] sm:$0xf]
    %v195 = vld [vmem:[#allocation5 + $0x210] sm:$0xf]
    %v196 = vld [vmem:[#allocation5 + $0x214] sm:$0xf]
    %v197 = vld [vmem:[#allocation5 + $0x218] sm:$0xf]
    %v198 = vld [vmem:[#allocation5 + $0x21c] sm:$0xf]
    %v199 = vld [vmem:[#allocation5 + $0x220] sm:$0xf]
    %v200 = vld [vmem:[#allocation5 + $0x224] sm:$0xf]
    %v201 = vld [vmem:[#allocation5 + $0x228] sm:$0xf]
    %v202 = vld [vmem:[#allocation5 + $0x22c] sm:$0xf]
    %v203 = vld [vmem:[#allocation5 + $0x230] sm:$0xf]
    %v204 = vld [vmem:[#allocation5 + $0x234] sm:$0xf]
    %v205 = vld [vmem:[#allocation5 + $0x238] sm:$0xf]
    %v206 = vld [vmem:[#allocation5 + $0x23c] sm:$0xf]
    %v207 = vld [vmem:[#allocation5 + $0x240] sm:$0xf]
    %v208 = vld [vmem:[#allocation5 + $0x244] sm:$0xf]
    %v209 = vld [vmem:[#allocation5 + $0x248] sm:$0xf]
    %v210 = vld [vmem:[#allocation5 + $0x24c] sm:$0xf]
    %v211 = vld [vmem:[#allocation5 + $0x250] sm:$0xf]
    %v212 = vld [vmem:[#allocation5 + $0x254] sm:$0xf]
    %v213 = vld [vmem:[#allocation5 + $0x258] sm:$0xf]
    %v214 = vld [vmem:[#allocation5 + $0x25c] sm:$0xf]
    %v215 = vld [vmem:[#allocation5 + $0x260] sm:$0xf]
    %v216 = vld [vmem:[#allocation5 + $0x264] sm:$0xf]
    %v217 = vld [vmem:[#allocation5 + $0x268] sm:$0xf]
    %v218 = vld [vmem:[#allocation5 + $0x26c] sm:$0xf]
    %v219 = vld [vmem:[#allocation5 + $0x270] sm:$0xf]
    %v220 = vld [vmem:[#allocation5 + $0x274] sm:$0xf]
    %v221 = vld [vmem:[#allocation5 + $0x278] sm:$0xf]
    %v222 = vld [vmem:[#allocation5 + $0x27c] sm:$0xf]
    %v223 = vld [vmem:[#allocation5 + $0x280] sm:$0xf]
    %v224 = vld [vmem:[#allocation5 + $0x284] sm:$0xf]
    %v225 = vld [vmem:[#allocation5 + $0x288] sm:$0xf]
    %v226 = vld [vmem:[#allocation5 + $0x28c] sm:$0xf]
    %v227 = vld [vmem:[#allocation5 + $0x290] sm:$0xf]
    %v228 = vld [vmem:[#allocation5 + $0x294] sm:$0xf]
    %v229 = vld [vmem:[#allocation5 + $0x298] sm:$0xf]
    %v230 = vld [vmem:[#allocation5 + $0x29c] sm:$0xf]
    %v231 = vld [vmem:[#allocation5 + $0x2a0] sm:$0xf]
    %v232 = vld [vmem:[#allocation5 + $0x2a4] sm:$0xf]
    %v233 = vld [vmem:[#allocation5 + $0x2a8] sm:$0xf]
    %v234 = vld [vmem:[#allocation5 + $0x2ac] sm:$0xf]
    %v235 = vld [vmem:[#allocation5 + $0x2b0] sm:$0xf]
    %v236 = vld [vmem:[#allocation5 + $0x2b4] sm:$0xf]
    %v237 = vld [vmem:[#allocation5 + $0x2b8] sm:$0xf]
    %v238 = vld [vmem:[#allocation5 + $0x2bc] sm:$0xf]
    %v239 = vld [vmem:[#allocation5 + $0x2c0] sm:$0xf]
    %v240 = vld [vmem:[#allocation5 + $0x2c4] sm:$0xf]
    %v241 = vld [vmem:[#allocation5 + $0x2c8] sm:$0xf]
    %v242 = vld [vmem:[#allocation5 + $0x2cc] sm:$0xf]
    %v243 = vld [vmem:[#allocation5 + $0x2d0] sm:$0xf]
    %v244 = vld [vmem:[#allocation5 + $0x2d4] sm:$0xf]
    %v245 = vld [vmem:[#allocation5 + $0x2d8] sm:$0xf]
    %v246 = vld [vmem:[#allocation5 + $0x2dc] sm:$0xf]
    %v247 = vld [vmem:[#allocation5 + $0x2e0] sm:$0xf]
    %v248 = vld [vmem:[#allocation5 + $0x2e4] sm:$0xf]
    %v249 = vld [vmem:[#allocation5 + $0x2e8] sm:$0xf]
    %v250 = vld [vmem:[#allocation5 + $0x2ec] sm:$0xf]
    %v251 = vld [vmem:[#allocation5 + $0x2f0] sm:$0xf]
    %v252 = vld [vmem:[#allocation5 + $0x2f4] sm:$0xf]
    %v253 = vld [vmem:[#allocation5 + $0x2f8] sm:$0xf]
    %v254 = vld [vmem:[#allocation5 + $0x2fc] sm:$0xf]
    %v255 = vld [vmem:[#allocation5 + $0x300] sm:$0xf]
    %v256 = vld [vmem:[#allocation5 + $0x304] sm:$0xf]
    %v257 = vld [vmem:[#allocation5 + $0x308] sm:$0xf]
    %v258 = vld [vmem:[#allocation5 + $0x30c] sm:$0xf]
    %v259 = vld [vmem:[#allocation5 + $0x310] sm:$0xf]
    %v260 = vld [vmem:[#allocation5 + $0x314] sm:$0xf]
    %v261 = vld [vmem:[#allocation5 + $0x318] sm:$0xf]
    %v262 = vld [vmem:[#allocation5 + $0x31c] sm:$0xf]
    %v263 = vld [vmem:[#allocation5 + $0x320] sm:$0xf]
    %v264 = vld [vmem:[#allocation5 + $0x324] sm:$0xf]
    %v265 = vld [vmem:[#allocation5 + $0x328] sm:$0xf]
    %v266 = vld [vmem:[#allocation5 + $0x32c] sm:$0xf]
    %v267 = vld [vmem:[#allocation5 + $0x330] sm:$0xf]
    %v268 = vld [vmem:[#allocation5 + $0x334] sm:$0xf]
    %v269 = vld [vmem:[#allocation5 + $0x338] sm:$0xf]
    %v270 = vld [vmem:[#allocation5 + $0x33c] sm:$0xf]
    %v271 = vld [vmem:[#allocation5 + $0x340] sm:$0xf]
    %v272 = vld [vmem:[#allocation5 + $0x344] sm:$0xf]
    %v273 = vld [vmem:[#allocation5 + $0x348] sm:$0xf]
    %v274 = vld [vmem:[#allocation5 + $0x34c] sm:$0xf]
    %v275 = vld [vmem:[#allocation5 + $0x350] sm:$0xf]
    %v276 = vld [vmem:[#allocation5 + $0x354] sm:$0xf]
    %v277 = vld [vmem:[#allocation5 + $0x358] sm:$0xf]
    %v278 = vld [vmem:[#allocation5 + $0x35c] sm:$0xf]
    %v279 = vld [vmem:[#allocation5 + $0x360] sm:$0xf]
    %v280 = vld [vmem:[#allocation5 + $0x364] sm:$0xf]
    %v281 = vld [vmem:[#allocation5 + $0x368] sm:$0xf]
    %v282 = vld [vmem:[#allocation5 + $0x36c] sm:$0xf]
    %v283 = vld [vmem:[#allocation5 + $0x370] sm:$0xf]
    %v284 = vld [vmem:[#allocation5 + $0x374] sm:$0xf]
    %v285 = vld [vmem:[#allocation5 + $0x378] sm:$0xf]
    %v286 = vld [vmem:[#allocation5 + $0x37c] sm:$0xf]
    %v287 = vld [vmem:[#allocation5 + $0x380] sm:$0xf]
    %v288 = vld [vmem:[#allocation5 + $0x384] sm:$0xf]
    %v289 = vld [vmem:[#allocation5 + $0x388] sm:$0xf]
    %v290 = vld [vmem:[#allocation5 + $0x38c] sm:$0xf]
    %v291 = vld [vmem:[#allocation5 + $0x390] sm:$0xf]
    %v292 = vld [vmem:[#allocation5 + $0x394] sm:$0xf]
    %v293 = vld [vmem:[#allocation5 + $0x398] sm:$0xf]
    %v294 = vld [vmem:[#allocation5 + $0x39c] sm:$0xf]
    %v295 = vld [vmem:[#allocation5 + $0x3a0] sm:$0xf]
    %v296 = vld [vmem:[#allocation5 + $0x3a4] sm:$0xf]
    %v297 = vld [vmem:[#allocation5 + $0x3a8] sm:$0xf]
    %v298 = vld [vmem:[#allocation5 + $0x3ac] sm:$0xf]
    %v299 = vld [vmem:[#allocation5 + $0x3b0] sm:$0xf]
    %v300 = vld [vmem:[#allocation5 + $0x3b4] sm:$0xf]
    %v301 = vld [vmem:[#allocation5 + $0x3b8] sm:$0xf]
    %v302 = vld [vmem:[#allocation5 + $0x3bc] sm:$0xf]
    %v303 = vld [vmem:[#allocation5 + $0x3c0] sm:$0xf]
    %v304 = vld [vmem:[#allocation5 + $0x3c4] sm:$0xf]
    %v305 = vld [vmem:[#allocation5 + $0x3c8] sm:$0xf]
    %v306 = vld [vmem:[#allocation5 + $0x3cc] sm:$0xf]
    %v307 = vld [vmem:[#allocation5 + $0x3d0] sm:$0xf]
    %v308 = vld [vmem:[#allocation5 + $0x3d4] sm:$0xf]
    %v309 = vld [vmem:[#allocation5 + $0x3d8] sm:$0xf]
    %v310 = vld [vmem:[#allocation5 + $0x3dc] sm:$0xf]
    %v311 = vld [vmem:[#allocation5 + $0x3e0] sm:$0xf]
    %v312 = vld [vmem:[#allocation5 + $0x3e4] sm:$0xf]
    %v313 = vld [vmem:[#allocation5 + $0x3e8] sm:$0xf]
    %v314 = vld [vmem:[#allocation5 + $0x3ec] sm:$0xf]
    %v315 = vld [vmem:[#allocation5 + $0x3f0] sm:$0xf]
    %v316 = vld [vmem:[#allocation5 + $0x3f4] sm:$0xf]
    %v317 = vld [vmem:[#allocation5 + $0x3f8] sm:$0xf]
    %v318 = vld [vmem:[#allocation5 + $0x3fc] sm:$0xf]
    %v335 = vunpack.c.l.b16 %v47
    %v336 = vunpack.c.h.b16 %v47
    %v337 = vunpack.c.l.b16 %v48
    %v338 = vunpack.c.h.b16 %v48
    %v339 = vunpack.c.l.b16 %v49
    %v340 = vunpack.c.h.b16 %v49
    %v341 = vunpack.c.l.b16 %v50
    %v342 = vunpack.c.h.b16 %v50
    %v343 = vunpack.c.l.b16 %v51
    %v344 = vunpack.c.h.b16 %v51
    %v345 = vunpack.c.l.b16 %v52
    %v346 = vunpack.c.h.b16 %v52
    %v347 = vunpack.c.l.b16 %v53
    %v348 = vunpack.c.h.b16 %v53
    %v349 = vunpack.c.l.b16 %v54
    %v350 = vunpack.c.h.b16 %v54
    %v351 = vunpack.c.l.b16 %v55
    %v352 = vunpack.c.h.b16 %v55
    %v353 = vunpack.c.l.b16 %v56
    %v354 = vunpack.c.h.b16 %v56
    %v355 = vunpack.c.l.b16 %v57
    %v356 = vunpack.c.h.b16 %v57
    %v357 = vunpack.c.l.b16 %v58
    %v358 = vunpack.c.h.b16 %v58
    %v359 = vunpack.c.l.b16 %v59
    %v360 = vunpack.c.h.b16 %v59
    %v361 = vunpack.c.l.b16 %v60
    %v362 = vunpack.c.h.b16 %v60
    %v363 = vunpack.c.l.b16 %v61
    %v364 = vunpack.c.h.b16 %v61
    %v365 = vunpack.c.l.b16 %v62
    %v366 = vunpack.c.h.b16 %v62
    %v367 = vpack.c.b16 %v351, %v335
    %v368 = vpack.c.b16 %v352, %v336
    %v369 = vpack.c.b16 %v353, %v337
    %v370 = vpack.c.b16 %v354, %v338
    %v371 = vpack.c.b16 %v355, %v339
    %v372 = vpack.c.b16 %v356, %v340
    %v373 = vpack.c.b16 %v357, %v341
    %v374 = vpack.c.b16 %v358, %v342
    %v375 = vpack.c.b16 %v359, %v343
    %v376 = vpack.c.b16 %v360, %v344
    %v377 = vpack.c.b16 %v361, %v345
    %v378 = vpack.c.b16 %v362, %v346
    %v379 = vpack.c.b16 %v363, %v347
    %v380 = vpack.c.b16 %v364, %v348
    %v381 = vpack.c.b16 %v365, %v349
    %v382 = vpack.c.b16 %v366, %v350
    %v655 = vunpack.c.l.b16 %v63
    %v656 = vunpack.c.l.b16 %v64
    %v657 = vunpack.c.l.b16 %v65
    %v658 = vunpack.c.l.b16 %v66
    %v659 = vunpack.c.l.b16 %v67
    %v660 = vunpack.c.l.b16 %v68
    %v661 = vunpack.c.l.b16 %v69
    %v662 = vunpack.c.l.b16 %v70
    %v663 = vunpack.c.l.b16 %v71
    %v664 = vunpack.c.l.b16 %v72
    %v665 = vunpack.c.l.b16 %v73
    %v666 = vunpack.c.l.b16 %v74
    %v667 = vunpack.c.l.b16 %v75
    %v668 = vunpack.c.l.b16 %v76
    %v669 = vunpack.c.l.b16 %v77
    %v670 = vunpack.c.l.b16 %v78
    %v671 = vunpack.c.l.b16 %v79
    %v672 = vunpack.c.l.b16 %v80
    %v673 = vunpack.c.l.b16 %v81
    %v674 = vunpack.c.l.b16 %v82
    %v675 = vunpack.c.l.b16 %v83
    %v676 = vunpack.c.l.b16 %v84
    %v677 = vunpack.c.l.b16 %v85
    %v678 = vunpack.c.l.b16 %v86
    %v679 = vunpack.c.l.b16 %v87
    %v680 = vunpack.c.l.b16 %v88
    %v681 = vunpack.c.l.b16 %v89
    %v682 = vunpack.c.l.b16 %v90
    %v683 = vunpack.c.l.b16 %v91
    %v684 = vunpack.c.l.b16 %v92
    %v685 = vunpack.c.l.b16 %v93
    %v686 = vunpack.c.l.b16 %v94
    %v687 = vunpack.c.l.b16 %v95
    %v688 = vunpack.c.l.b16 %v96
    %v689 = vunpack.c.l.b16 %v97
    %v690 = vunpack.c.l.b16 %v98
    %v691 = vunpack.c.l.b16 %v99
    %v692 = vunpack.c.l.b16 %v100
    %v693 = vunpack.c.l.b16 %v101
    %v694 = vunpack.c.l.b16 %v102
    %v695 = vunpack.c.l.b16 %v103
    %v696 = vunpack.c.l.b16 %v104
    %v697 = vunpack.c.l.b16 %v105
    %v698 = vunpack.c.l.b16 %v106
    %v699 = vunpack.c.l.b16 %v107
    %v700 = vunpack.c.l.b16 %v108
    %v701 = vunpack.c.l.b16 %v109
    %v702 = vunpack.c.l.b16 %v110
    %v703 = vunpack.c.l.b16 %v111
    %v704 = vunpack.c.l.b16 %v112
    %v705 = vunpack.c.l.b16 %v113
    %v706 = vunpack.c.l.b16 %v114
    %v707 = vunpack.c.l.b16 %v115
    %v708 = vunpack.c.l.b16 %v116
    %v709 = vunpack.c.l.b16 %v117
    %v710 = vunpack.c.l.b16 %v118
    %v711 = vunpack.c.l.b16 %v119
    %v712 = vunpack.c.l.b16 %v120
    %v713 = vunpack.c.l.b16 %v121
    %v714 = vunpack.c.l.b16 %v122
    %v715 = vunpack.c.l.b16 %v123
    %v716 = vunpack.c.l.b16 %v124
    %v717 = vunpack.c.l.b16 %v125
    %v718 = vunpack.c.l.b16 %v126
    %v719 = vunpack.c.l.b16 %v127
    %v720 = vunpack.c.l.b16 %v128
    %v721 = vunpack.c.l.b16 %v129
    %v722 = vunpack.c.l.b16 %v130
    %v723 = vunpack.c.l.b16 %v131
    %v724 = vunpack.c.l.b16 %v132
    %v725 = vunpack.c.l.b16 %v133
    %v726 = vunpack.c.l.b16 %v134
    %v727 = vunpack.c.l.b16 %v135
    %v728 = vunpack.c.l.b16 %v136
    %v729 = vunpack.c.l.b16 %v137
    %v730 = vunpack.c.l.b16 %v138
    %v731 = vunpack.c.l.b16 %v139
    %v732 = vunpack.c.l.b16 %v140
    %v733 = vunpack.c.l.b16 %v141
    %v734 = vunpack.c.l.b16 %v142
    %v735 = vunpack.c.l.b16 %v143
    %v736 = vunpack.c.l.b16 %v144
    %v737 = vunpack.c.l.b16 %v145
    %v738 = vunpack.c.l.b16 %v146
    %v739 = vunpack.c.l.b16 %v147
    %v740 = vunpack.c.l.b16 %v148
    %v741 = vunpack.c.l.b16 %v149
    %v742 = vunpack.c.l.b16 %v150
    %v743 = vunpack.c.l.b16 %v151
    %v744 = vunpack.c.l.b16 %v152
    %v745 = vunpack.c.l.b16 %v153
    %v746 = vunpack.c.l.b16 %v154
    %v747 = vunpack.c.l.b16 %v155
    %v748 = vunpack.c.l.b16 %v156
    %v749 = vunpack.c.l.b16 %v157
    %v750 = vunpack.c.l.b16 %v158
    %v751 = vunpack.c.l.b16 %v159
    %v752 = vunpack.c.l.b16 %v160
    %v753 = vunpack.c.l.b16 %v161
    %v754 = vunpack.c.l.b16 %v162
    %v755 = vunpack.c.l.b16 %v163
    %v756 = vunpack.c.l.b16 %v164
    %v757 = vunpack.c.l.b16 %v165
    %v758 = vunpack.c.l.b16 %v166
    %v759 = vunpack.c.l.b16 %v167
    %v760 = vunpack.c.l.b16 %v168
    %v761 = vunpack.c.l.b16 %v169
    %v762 = vunpack.c.l.b16 %v170
    %v763 = vunpack.c.l.b16 %v171
    %v764 = vunpack.c.l.b16 %v172
    %v765 = vunpack.c.l.b16 %v173
    %v766 = vunpack.c.l.b16 %v174
    %v767 = vunpack.c.l.b16 %v175
    %v768 = vunpack.c.l.b16 %v176
    %v769 = vunpack.c.l.b16 %v177
    %v770 = vunpack.c.l.b16 %v178
    %v771 = vunpack.c.l.b16 %v179
    %v772 = vunpack.c.l.b16 %v180
    %v773 = vunpack.c.l.b16 %v181
    %v774 = vunpack.c.l.b16 %v182
    %v775 = vunpack.c.l.b16 %v183
    %v776 = vunpack.c.l.b16 %v184
    %v777 = vunpack.c.l.b16 %v185
    %v778 = vunpack.c.l.b16 %v186
    %v779 = vunpack.c.l.b16 %v187
    %v780 = vunpack.c.l.b16 %v188
    %v781 = vunpack.c.l.b16 %v189
    %v782 = vunpack.c.l.b16 %v190
    %v783 = vunpack.c.l.b16 %v191
    %v784 = vunpack.c.l.b16 %v192
    %v785 = vunpack.c.l.b16 %v193
    %v786 = vunpack.c.l.b16 %v194
    %v787 = vunpack.c.l.b16 %v195
    %v788 = vunpack.c.l.b16 %v196
    %v789 = vunpack.c.l.b16 %v197
    %v790 = vunpack.c.l.b16 %v198
    %v791 = vunpack.c.l.b16 %v199
    %v792 = vunpack.c.l.b16 %v200
    %v793 = vunpack.c.l.b16 %v201
    %v794 = vunpack.c.l.b16 %v202
    %v795 = vunpack.c.l.b16 %v203
    %v796 = vunpack.c.l.b16 %v204
    %v797 = vunpack.c.l.b16 %v205
    %v798 = vunpack.c.l.b16 %v206
    %v799 = vunpack.c.l.b16 %v207
    %v800 = vunpack.c.l.b16 %v208
    %v801 = vunpack.c.l.b16 %v209
    %v802 = vunpack.c.l.b16 %v210
    %v803 = vunpack.c.l.b16 %v211
    %v804 = vunpack.c.l.b16 %v212
    %v805 = vunpack.c.l.b16 %v213
    %v806 = vunpack.c.l.b16 %v214
    %v807 = vunpack.c.l.b16 %v215
    %v808 = vunpack.c.l.b16 %v216
    %v809 = vunpack.c.l.b16 %v217
    %v810 = vunpack.c.l.b16 %v218
    %v811 = vunpack.c.l.b16 %v219
    %v812 = vunpack.c.l.b16 %v220
    %v813 = vunpack.c.l.b16 %v221
    %v814 = vunpack.c.l.b16 %v222
    %v815 = vunpack.c.l.b16 %v223
    %v816 = vunpack.c.l.b16 %v224
    %v817 = vunpack.c.l.b16 %v225
    %v818 = vunpack.c.l.b16 %v226
    %v819 = vunpack.c.l.b16 %v227
    %v820 = vunpack.c.l.b16 %v228
    %v821 = vunpack.c.l.b16 %v229
    %v822 = vunpack.c.l.b16 %v230
    %v823 = vunpack.c.l.b16 %v231
    %v824 = vunpack.c.l.b16 %v232
    %v825 = vunpack.c.l.b16 %v233
    %v826 = vunpack.c.l.b16 %v234
    %v827 = vunpack.c.l.b16 %v235
    %v828 = vunpack.c.l.b16 %v236
    %v829 = vunpack.c.l.b16 %v237
    %v830 = vunpack.c.l.b16 %v238
    %v831 = vunpack.c.l.b16 %v239
    %v832 = vunpack.c.l.b16 %v240
    %v833 = vunpack.c.l.b16 %v241
    %v834 = vunpack.c.l.b16 %v242
    %v835 = vunpack.c.l.b16 %v243
    %v836 = vunpack.c.l.b16 %v244
    %v837 = vunpack.c.l.b16 %v245
    %v838 = vunpack.c.l.b16 %v246
    %v839 = vunpack.c.l.b16 %v247
    %v840 = vunpack.c.l.b16 %v248
    %v841 = vunpack.c.l.b16 %v249
    %v842 = vunpack.c.l.b16 %v250
    %v843 = vunpack.c.l.b16 %v251
    %v844 = vunpack.c.l.b16 %v252
    %v845 = vunpack.c.l.b16 %v253
    %v846 = vunpack.c.l.b16 %v254
    %v847 = vunpack.c.l.b16 %v255
    %v848 = vunpack.c.l.b16 %v256
    %v849 = vunpack.c.l.b16 %v257
    %v850 = vunpack.c.l.b16 %v258
    %v851 = vunpack.c.l.b16 %v259
    %v852 = vunpack.c.l.b16 %v260
    %v853 = vunpack.c.l.b16 %v261
    %v854 = vunpack.c.l.b16 %v262
    %v855 = vunpack.c.l.b16 %v263
    %v856 = vunpack.c.l.b16 %v264
    %v857 = vunpack.c.l.b16 %v265
    %v858 = vunpack.c.l.b16 %v266
    %v859 = vunpack.c.l.b16 %v267
    %v860 = vunpack.c.l.b16 %v268
    %v861 = vunpack.c.l.b16 %v269
    %v862 = vunpack.c.l.b16 %v270
    %v863 = vunpack.c.l.b16 %v271
    %v864 = vunpack.c.l.b16 %v272
    %v865 = vunpack.c.l.b16 %v273
    %v866 = vunpack.c.l.b16 %v274
    %v867 = vunpack.c.l.b16 %v275
    %v868 = vunpack.c.l.b16 %v276
    %v869 = vunpack.c.l.b16 %v277
    %v870 = vunpack.c.l.b16 %v278
    %v871 = vunpack.c.l.b16 %v279
    %v872 = vunpack.c.l.b16 %v280
    %v873 = vunpack.c.l.b16 %v281
    %v874 = vunpack.c.l.b16 %v282
    %v875 = vunpack.c.l.b16 %v283
    %v876 = vunpack.c.l.b16 %v284
    %v877 = vunpack.c.l.b16 %v285
    %v878 = vunpack.c.l.b16 %v286
    %v879 = vunpack.c.l.b16 %v287
    %v880 = vunpack.c.l.b16 %v288
    %v881 = vunpack.c.l.b16 %v289
    %v882 = vunpack.c.l.b16 %v290
    %v883 = vunpack.c.l.b16 %v291
    %v884 = vunpack.c.l.b16 %v292
    %v885 = vunpack.c.l.b16 %v293
    %v886 = vunpack.c.l.b16 %v294
    %v887 = vunpack.c.l.b16 %v295
    %v888 = vunpack.c.l.b16 %v296
    %v889 = vunpack.c.l.b16 %v297
    %v890 = vunpack.c.l.b16 %v298
    %v891 = vunpack.c.l.b16 %v299
    %v892 = vunpack.c.l.b16 %v300
    %v893 = vunpack.c.l.b16 %v301
    %v894 = vunpack.c.l.b16 %v302
    %v895 = vunpack.c.l.b16 %v303
    %v896 = vunpack.c.l.b16 %v304
    %v897 = vunpack.c.l.b16 %v305
    %v898 = vunpack.c.l.b16 %v306
    %v899 = vunpack.c.l.b16 %v307
    %v900 = vunpack.c.l.b16 %v308
    %v901 = vunpack.c.l.b16 %v309
    %v902 = vunpack.c.l.b16 %v310
    %v903 = vunpack.c.l.b16 %v311
    %v904 = vunpack.c.l.b16 %v312
    %v905 = vunpack.c.l.b16 %v313
    %v906 = vunpack.c.l.b16 %v314
    %v907 = vunpack.c.l.b16 %v315
    %v908 = vunpack.c.l.b16 %v316
    %v909 = vunpack.c.l.b16 %v317
    %v910 = vunpack.c.l.b16 %v318
    %v911 = vpack.c.b16 %v656, %v655
    %v912 = vpack.c.b16 %v658, %v657
    %v913 = vpack.c.b16 %v660, %v659
    %v914 = vpack.c.b16 %v662, %v661
    %v915 = vpack.c.b16 %v664, %v663
    %v916 = vpack.c.b16 %v666, %v665
    %v917 = vpack.c.b16 %v668, %v667
    %v918 = vpack.c.b16 %v670, %v669
    %v919 = vpack.c.b16 %v672, %v671
    %v920 = vpack.c.b16 %v674, %v673
    %v921 = vpack.c.b16 %v676, %v675
    %v922 = vpack.c.b16 %v678, %v677
    %v923 = vpack.c.b16 %v680, %v679
    %v924 = vpack.c.b16 %v682, %v681
    %v925 = vpack.c.b16 %v684, %v683
    %v926 = vpack.c.b16 %v686, %v685
    %v927 = vpack.c.b16 %v688, %v687
    %v928 = vpack.c.b16 %v690, %v689
    %v929 = vpack.c.b16 %v692, %v691
    %v930 = vpack.c.b16 %v694, %v693
    %v931 = vpack.c.b16 %v696, %v695
    %v932 = vpack.c.b16 %v698, %v697
    %v933 = vpack.c.b16 %v700, %v699
    %v934 = vpack.c.b16 %v702, %v701
    %v935 = vpack.c.b16 %v704, %v703
    %v936 = vpack.c.b16 %v706, %v705
    %v937 = vpack.c.b16 %v708, %v707
    %v938 = vpack.c.b16 %v710, %v709
    %v939 = vpack.c.b16 %v712, %v711
    %v940 = vpack.c.b16 %v714, %v713
    %v941 = vpack.c.b16 %v716, %v715
    %v942 = vpack.c.b16 %v718, %v717
    %v943 = vpack.c.b16 %v720, %v719
    %v944 = vpack.c.b16 %v722, %v721
    %v945 = vpack.c.b16 %v724, %v723
    %v946 = vpack.c.b16 %v726, %v725
    %v947 = vpack.c.b16 %v728, %v727
    %v948 = vpack.c.b16 %v730, %v729
    %v949 = vpack.c.b16 %v732, %v731
    %v950 = vpack.c.b16 %v734, %v733
    %v951 = vpack.c.b16 %v736, %v735
    %v952 = vpack.c.b16 %v738, %v737
    %v953 = vpack.c.b16 %v740, %v739
    %v954 = vpack.c.b16 %v742, %v741
    %v955 = vpack.c.b16 %v744, %v743
    %v956 = vpack.c.b16 %v746, %v745
    %v957 = vpack.c.b16 %v748, %v747
    %v958 = vpack.c.b16 %v750, %v749
    %v959 = vpack.c.b16 %v752, %v751
    %v960 = vpack.c.b16 %v754, %v753
    %v961 = vpack.c.b16 %v756, %v755
    %v962 = vpack.c.b16 %v758, %v757
    %v963 = vpack.c.b16 %v760, %v759
    %v964 = vpack.c.b16 %v762, %v761
    %v965 = vpack.c.b16 %v764, %v763
    %v966 = vpack.c.b16 %v766, %v765
    %v967 = vpack.c.b16 %v768, %v767
    %v968 = vpack.c.b16 %v770, %v769
    %v969 = vpack.c.b16 %v772, %v771
    %v970 = vpack.c.b16 %v774, %v773
    %v971 = vpack.c.b16 %v776, %v775
    %v972 = vpack.c.b16 %v778, %v777
    %v973 = vpack.c.b16 %v780, %v779
    %v974 = vpack.c.b16 %v782, %v781
    %v975 = vpack.c.b16 %v784, %v783
    %v976 = vpack.c.b16 %v786, %v785
    %v977 = vpack.c.b16 %v788, %v787
    %v978 = vpack.c.b16 %v790, %v789
    %v979 = vpack.c.b16 %v792, %v791
    %v980 = vpack.c.b16 %v794, %v793
    %v981 = vpack.c.b16 %v796, %v795
    %v982 = vpack.c.b16 %v798, %v797
    %v983 = vpack.c.b16 %v800, %v799
    %v984 = vpack.c.b16 %v802, %v801
    %v985 = vpack.c.b16 %v804, %v803
    %v986 = vpack.c.b16 %v806, %v805
    %v987 = vpack.c.b16 %v808, %v807
    %v988 = vpack.c.b16 %v810, %v809
    %v989 = vpack.c.b16 %v812, %v811
    %v990 = vpack.c.b16 %v814, %v813
    %v991 = vpack.c.b16 %v816, %v815
    %v992 = vpack.c.b16 %v818, %v817
    %v993 = vpack.c.b16 %v820, %v819
    %v994 = vpack.c.b16 %v822, %v821
    %v995 = vpack.c.b16 %v824, %v823
    %v996 = vpack.c.b16 %v826, %v825
    %v997 = vpack.c.b16 %v828, %v827
    %v998 = vpack.c.b16 %v830, %v829
    %v999 = vpack.c.b16 %v832, %v831
    %v1000 = vpack.c.b16 %v834, %v833
    %v1001 = vpack.c.b16 %v836, %v835
    %v1002 = vpack.c.b16 %v838, %v837
    %v1003 = vpack.c.b16 %v840, %v839
    %v1004 = vpack.c.b16 %v842, %v841
    %v1005 = vpack.c.b16 %v844, %v843
    %v1006 = vpack.c.b16 %v846, %v845
    %v1007 = vpack.c.b16 %v848, %v847
    %v1008 = vpack.c.b16 %v850, %v849
    %v1009 = vpack.c.b16 %v852, %v851
    %v1010 = vpack.c.b16 %v854, %v853
    %v1011 = vpack.c.b16 %v856, %v855
    %v1012 = vpack.c.b16 %v858, %v857
    %v1013 = vpack.c.b16 %v860, %v859
    %v1014 = vpack.c.b16 %v862, %v861
    %v1015 = vpack.c.b16 %v864, %v863
    %v1016 = vpack.c.b16 %v866, %v865
    %v1017 = vpack.c.b16 %v868, %v867
    %v1018 = vpack.c.b16 %v870, %v869
    %v1019 = vpack.c.b16 %v872, %v871
    %v1020 = vpack.c.b16 %v874, %v873
    %v1021 = vpack.c.b16 %v876, %v875
    %v1022 = vpack.c.b16 %v878, %v877
    %v1023 = vpack.c.b16 %v880, %v879
    %v1024 = vpack.c.b16 %v882, %v881
    %v1025 = vpack.c.b16 %v884, %v883
    %v1026 = vpack.c.b16 %v886, %v885
    %v1027 = vpack.c.b16 %v888, %v887
    %v1028 = vpack.c.b16 %v890, %v889
    %v1029 = vpack.c.b16 %v892, %v891
    %v1030 = vpack.c.b16 %v894, %v893
    %v1031 = vpack.c.b16 %v896, %v895
    %v1032 = vpack.c.b16 %v898, %v897
    %v1033 = vpack.c.b16 %v900, %v899
    %v1034 = vpack.c.b16 %v902, %v901
    %v1035 = vpack.c.b16 %v904, %v903
    %v1036 = vpack.c.b16 %v906, %v905
    %v1037 = vpack.c.b16 %v908, %v907
    %v1038 = vpack.c.b16 %v910, %v909
    %1167 = vmatprep.subr.bf16.mxu0 0
    %1168 = vmatpush1.bf16.msra.mxu0 %v918
    %1169 = vmatprep.subr.bf16.mxu0 0
    %1170 = vmatpush1.bf16.msra.mxu0 %v917
    %1171 = vmatprep.subr.bf16.mxu0 0
    %1172 = vmatpush1.bf16.msra.mxu0 %v916
    %1173 = vmatprep.subr.bf16.mxu0 0
    %1174 = vmatpush1.bf16.msra.mxu0 %v915
    %1175 = vmatprep.subr.bf16.mxu0 0
    %1176 = vmatpush1.bf16.msra.mxu0 %v914
    %1177 = vmatprep.subr.bf16.mxu0 0
    %1178 = vmatpush1.bf16.msra.mxu0 %v913
    %1179 = vmatprep.subr.bf16.mxu0 0
    %1180 = vmatpush1.bf16.msra.mxu0 %v912
    %1181 = vmatprep.subr.bf16.mxu0 0
    %1182 = vmatpush1.bf16.msra.mxu0 %v911
    %1183 = vmatprep.subr.bf16.mxu0 0
    %1184 = vmatpush2.bf16.msra.mxu0 %v926
    %1185 = vmatprep.subr.bf16.mxu0 0
    %1186 = vmatpush2.bf16.msra.mxu0 %v925
    %1187 = vmatprep.subr.bf16.mxu0 0
    %1188 = vmatpush2.bf16.msra.mxu0 %v924
    %1189 = vmatprep.subr.bf16.mxu0 0
    %1190 = vmatpush2.bf16.msra.mxu0 %v923
    %1191 = vmatprep.subr.bf16.mxu0 0
    %1192 = vmatpush2.bf16.msra.mxu0 %v922
    %1193 = vmatprep.subr.bf16.mxu0 0
    %1194 = vmatpush2.bf16.msra.mxu0 %v921
    %1195 = vmatprep.subr.bf16.mxu0 0
    %1196 = vmatpush2.bf16.msra.mxu0 %v920
    %1197 = vmatprep.subr.bf16.mxu0 0
    %1198 = vmatpush2.bf16.msra.mxu0 %v919
    %1199 = vmatprep.mubr.bf16.mxu0 %v368
    %1200 = vmatmul.mubr.bf16.gmra.mxu0 %v367
    %v1201 = vpop.f32.mrf.mxu0
    %v1202 = vadd.f32 0.0, %v1201
    %v1203 = vpop.f32.mrf.mxu0
    %v1204 = vpop.f32.mrf.mxu0
    %v1205 = vadd.f32 0.0, %v1204
    %v1206 = vpop.f32.mrf.mxu0
    %1207 = vdwg.mxu0
    %1208 = vmatprep.subr.bf16.mxu0 0
    %1209 = vmatpush1.bf16.msra.mxu0 %v934
    %1210 = vmatprep.subr.bf16.mxu0 0
    %1211 = vmatpush1.bf16.msra.mxu0 %v933
    %1212 = vmatprep.subr.bf16.mxu0 0
    %1213 = vmatpush1.bf16.msra.mxu0 %v932
    %1214 = vmatprep.subr.bf16.mxu0 0
    %1215 = vmatpush1.bf16.msra.mxu0 %v931
    %1216 = vmatprep.subr.bf16.mxu0 0
    %1217 = vmatpush1.bf16.msra.mxu0 %v930
    %1218 = vmatprep.subr.bf16.mxu0 0
    %1219 = vmatpush1.bf16.msra.mxu0 %v929
    %1220 = vmatprep.subr.bf16.mxu0 0
    %1221 = vmatpush1.bf16.msra.mxu0 %v928
    %1222 = vmatprep.subr.bf16.mxu0 0
    %1223 = vmatpush1.bf16.msra.mxu0 %v927
    %1224 = vmatprep.subr.bf16.mxu0 0
    %1225 = vmatpush2.bf16.msra.mxu0 %v942
    %1226 = vmatprep.subr.bf16.mxu0 0
    %1227 = vmatpush2.bf16.msra.mxu0 %v941
    %1228 = vmatprep.subr.bf16.mxu0 0
    %1229 = vmatpush2.bf16.msra.mxu0 %v940
    %1230 = vmatprep.subr.bf16.mxu0 0
    %1231 = vmatpush2.bf16.msra.mxu0 %v939
    %1232 = vmatprep.subr.bf16.mxu0 0
    %1233 = vmatpush2.bf16.msra.mxu0 %v938
    %1234 = vmatprep.subr.bf16.mxu0 0
    %1235 = vmatpush2.bf16.msra.mxu0 %v937
    %1236 = vmatprep.subr.bf16.mxu0 0
    %1237 = vmatpush2.bf16.msra.mxu0 %v936
    %1238 = vmatprep.subr.bf16.mxu0 0
    %1239 = vmatpush2.bf16.msra.mxu0 %v935
    %1240 = vmatprep.mubr.bf16.mxu0 %v370
    %1241 = vmatmul.mubr.bf16.gmra.mxu0 %v369
    %v1242 = vpop.f32.mrf.mxu0
    %v1243 = vadd.f32 %v1202, %v1242
    %v1244 = vpop.f32.mrf.mxu0
    %v1245 = vpop.f32.mrf.mxu0
    %v1246 = vadd.f32 %v1205, %v1245
    %v1247 = vpop.f32.mrf.mxu0
    %1248 = vdwg.mxu0
    %1249 = vmatprep.subr.bf16.mxu0 0
    %1250 = vmatpush1.bf16.msra.mxu0 %v950
    %1251 = vmatprep.subr.bf16.mxu0 0
    %1252 = vmatpush1.bf16.msra.mxu0 %v949
    %1253 = vmatprep.subr.bf16.mxu0 0
    %1254 = vmatpush1.bf16.msra.mxu0 %v948
    %1255 = vmatprep.subr.bf16.mxu0 0
    %1256 = vmatpush1.bf16.msra.mxu0 %v947
    %1257 = vmatprep.subr.bf16.mxu0 0
    %1258 = vmatpush1.bf16.msra.mxu0 %v946
    %1259 = vmatprep.subr.bf16.mxu0 0
    %1260 = vmatpush1.bf16.msra.mxu0 %v945
    %1261 = vmatprep.subr.bf16.mxu0 0
    %1262 = vmatpush1.bf16.msra.mxu0 %v944
    %1263 = vmatprep.subr.bf16.mxu0 0
    %1264 = vmatpush1.bf16.msra.mxu0 %v943
    %1265 = vmatprep.subr.bf16.mxu0 0
    %1266 = vmatpush2.bf16.msra.mxu0 %v958
    %1267 = vmatprep.subr.bf16.mxu0 0
    %1268 = vmatpush2.bf16.msra.mxu0 %v957
    %1269 = vmatprep.subr.bf16.mxu0 0
    %1270 = vmatpush2.bf16.msra.mxu0 %v956
    %1271 = vmatprep.subr.bf16.mxu0 0
    %1272 = vmatpush2.bf16.msra.mxu0 %v955
    %1273 = vmatprep.subr.bf16.mxu0 0
    %1274 = vmatpush2.bf16.msra.mxu0 %v954
    %1275 = vmatprep.subr.bf16.mxu0 0
    %1276 = vmatpush2.bf16.msra.mxu0 %v953
    %1277 = vmatprep.subr.bf16.mxu0 0
    %1278 = vmatpush2.bf16.msra.mxu0 %v952
    %1279 = vmatprep.subr.bf16.mxu0 0
    %1280 = vmatpush2.bf16.msra.mxu0 %v951
    %1281 = vmatprep.mubr.bf16.mxu0 %v372
    %1282 = vmatmul.mubr.bf16.gmra.mxu0 %v371
    %v1283 = vpop.f32.mrf.mxu0
    %v1284 = vadd.f32 %v1243, %v1283
    %v1285 = vpop.f32.mrf.mxu0
    %v1286 = vpop.f32.mrf.mxu0
    %v1287 = vadd.f32 %v1246, %v1286
    %v1288 = vpop.f32.mrf.mxu0
    %1289 = vdwg.mxu0
    %1290 = vmatprep.subr.bf16.mxu0 0
    %1291 = vmatpush1.bf16.msra.mxu0 %v966
    %1292 = vmatprep.subr.bf16.mxu0 0
    %1293 = vmatpush1.bf16.msra.mxu0 %v965
    %1294 = vmatprep.subr.bf16.mxu0 0
    %1295 = vmatpush1.bf16.msra.mxu0 %v964
    %1296 = vmatprep.subr.bf16.mxu0 0
    %1297 = vmatpush1.bf16.msra.mxu0 %v963
    %1298 = vmatprep.subr.bf16.mxu0 0
    %1299 = vmatpush1.bf16.msra.mxu0 %v962
    %1300 = vmatprep.subr.bf16.mxu0 0
    %1301 = vmatpush1.bf16.msra.mxu0 %v961
    %1302 = vmatprep.subr.bf16.mxu0 0
    %1303 = vmatpush1.bf16.msra.mxu0 %v960
    %1304 = vmatprep.subr.bf16.mxu0 0
    %1305 = vmatpush1.bf16.msra.mxu0 %v959
    %1306 = vmatprep.subr.bf16.mxu0 0
    %1307 = vmatpush2.bf16.msra.mxu0 %v974
    %1308 = vmatprep.subr.bf16.mxu0 0
    %1309 = vmatpush2.bf16.msra.mxu0 %v973
    %1310 = vmatprep.subr.bf16.mxu0 0
    %1311 = vmatpush2.bf16.msra.mxu0 %v972
    %1312 = vmatprep.subr.bf16.mxu0 0
    %1313 = vmatpush2.bf16.msra.mxu0 %v971
    %1314 = vmatprep.subr.bf16.mxu0 0
    %1315 = vmatpush2.bf16.msra.mxu0 %v970
    %1316 = vmatprep.subr.bf16.mxu0 0
    %1317 = vmatpush2.bf16.msra.mxu0 %v969
    %1318 = vmatprep.subr.bf16.mxu0 0
    %1319 = vmatpush2.bf16.msra.mxu0 %v968
    %1320 = vmatprep.subr.bf16.mxu0 0
    %1321 = vmatpush2.bf16.msra.mxu0 %v967
    %1322 = vmatprep.mubr.bf16.mxu0 %v374
    %1323 = vmatmul.mubr.bf16.gmra.mxu0 %v373
    %v1324 = vpop.f32.mrf.mxu0
    %v1325 = vadd.f32 %v1284, %v1324
    %v1326 = vpop.f32.mrf.mxu0
    %v1327 = vpop.f32.mrf.mxu0
    %v1328 = vadd.f32 %v1287, %v1327
    %v1329 = vpop.f32.mrf.mxu0
    %1330 = vdwg.mxu0
    %1331 = vmatprep.subr.bf16.mxu0 0
    %1332 = vmatpush1.bf16.msra.mxu0 %v982
    %1333 = vmatprep.subr.bf16.mxu0 0
    %1334 = vmatpush1.bf16.msra.mxu0 %v981
    %1335 = vmatprep.subr.bf16.mxu0 0
    %1336 = vmatpush1.bf16.msra.mxu0 %v980
    %1337 = vmatprep.subr.bf16.mxu0 0
    %1338 = vmatpush1.bf16.msra.mxu0 %v979
    %1339 = vmatprep.subr.bf16.mxu0 0
    %1340 = vmatpush1.bf16.msra.mxu0 %v978
    %1341 = vmatprep.subr.bf16.mxu0 0
    %1342 = vmatpush1.bf16.msra.mxu0 %v977
    %1343 = vmatprep.subr.bf16.mxu0 0
    %1344 = vmatpush1.bf16.msra.mxu0 %v976
    %1345 = vmatprep.subr.bf16.mxu0 0
    %1346 = vmatpush1.bf16.msra.mxu0 %v975
    %1347 = vmatprep.subr.bf16.mxu0 0
    %1348 = vmatpush2.bf16.msra.mxu0 %v990
    %1349 = vmatprep.subr.bf16.mxu0 0
    %1350 = vmatpush2.bf16.msra.mxu0 %v989
    %1351 = vmatprep.subr.bf16.mxu0 0
    %1352 = vmatpush2.bf16.msra.mxu0 %v988
    %1353 = vmatprep.subr.bf16.mxu0 0
    %1354 = vmatpush2.bf16.msra.mxu0 %v987
    %1355 = vmatprep.subr.bf16.mxu0 0
    %1356 = vmatpush2.bf16.msra.mxu0 %v986
    %1357 = vmatprep.subr.bf16.mxu0 0
    %1358 = vmatpush2.bf16.msra.mxu0 %v985
    %1359 = vmatprep.subr.bf16.mxu0 0
    %1360 = vmatpush2.bf16.msra.mxu0 %v984
    %1361 = vmatprep.subr.bf16.mxu0 0
    %1362 = vmatpush2.bf16.msra.mxu0 %v983
    %1363 = vmatprep.mubr.bf16.mxu0 %v376
    %1364 = vmatmul.mubr.bf16.gmra.mxu0 %v375
    %v1365 = vpop.f32.mrf.mxu0
    %v1366 = vadd.f32 %v1325, %v1365
    %v1367 = vpop.f32.mrf.mxu0
    %v1368 = vpop.f32.mrf.mxu0
    %v1369 = vadd.f32 %v1328, %v1368
    %v1370 = vpop.f32.mrf.mxu0
    %1371 = vdwg.mxu0
    %1372 = vmatprep.subr.bf16.mxu0 0
    %1373 = vmatpush1.bf16.msra.mxu0 %v998
    %1374 = vmatprep.subr.bf16.mxu0 0
    %1375 = vmatpush1.bf16.msra.mxu0 %v997
    %1376 = vmatprep.subr.bf16.mxu0 0
    %1377 = vmatpush1.bf16.msra.mxu0 %v996
    %1378 = vmatprep.subr.bf16.mxu0 0
    %1379 = vmatpush1.bf16.msra.mxu0 %v995
    %1380 = vmatprep.subr.bf16.mxu0 0
    %1381 = vmatpush1.bf16.msra.mxu0 %v994
    %1382 = vmatprep.subr.bf16.mxu0 0
    %1383 = vmatpush1.bf16.msra.mxu0 %v993
    %1384 = vmatprep.subr.bf16.mxu0 0
    %1385 = vmatpush1.bf16.msra.mxu0 %v992
    %1386 = vmatprep.subr.bf16.mxu0 0
    %1387 = vmatpush1.bf16.msra.mxu0 %v991
    %1388 = vmatprep.subr.bf16.mxu0 0
    %1389 = vmatpush2.bf16.msra.mxu0 %v1006
    %1390 = vmatprep.subr.bf16.mxu0 0
    %1391 = vmatpush2.bf16.msra.mxu0 %v1005
    %1392 = vmatprep.subr.bf16.mxu0 0
    %1393 = vmatpush2.bf16.msra.mxu0 %v1004
    %1394 = vmatprep.subr.bf16.mxu0 0
    %1395 = vmatpush2.bf16.msra.mxu0 %v1003
    %1396 = vmatprep.subr.bf16.mxu0 0
    %1397 = vmatpush2.bf16.msra.mxu0 %v1002
    %1398 = vmatprep.subr.bf16.mxu0 0
    %1399 = vmatpush2.bf16.msra.mxu0 %v1001
    %1400 = vmatprep.subr.bf16.mxu0 0
    %1401 = vmatpush2.bf16.msra.mxu0 %v1000
    %1402 = vmatprep.subr.bf16.mxu0 0
    %1403 = vmatpush2.bf16.msra.mxu0 %v999
    %1404 = vmatprep.mubr.bf16.mxu0 %v378
    %1405 = vmatmul.mubr.bf16.gmra.mxu0 %v377
    %v1406 = vpop.f32.mrf.mxu0
    %v1407 = vadd.f32 %v1366, %v1406
    %v1408 = vpop.f32.mrf.mxu0
    %v1409 = vpop.f32.mrf.mxu0
    %v1410 = vadd.f32 %v1369, %v1409
    %v1411 = vpop.f32.mrf.mxu0
    %1412 = vdwg.mxu0
    %1413 = vmatprep.subr.bf16.mxu0 0
    %1414 = vmatpush1.bf16.msra.mxu0 %v1014
    %1415 = vmatprep.subr.bf16.mxu0 0
    %1416 = vmatpush1.bf16.msra.mxu0 %v1013
    %1417 = vmatprep.subr.bf16.mxu0 0
    %1418 = vmatpush1.bf16.msra.mxu0 %v1012
    %1419 = vmatprep.subr.bf16.mxu0 0
    %1420 = vmatpush1.bf16.msra.mxu0 %v1011
    %1421 = vmatprep.subr.bf16.mxu0 0
    %1422 = vmatpush1.bf16.msra.mxu0 %v1010
    %1423 = vmatprep.subr.bf16.mxu0 0
    %1424 = vmatpush1.bf16.msra.mxu0 %v1009
    %1425 = vmatprep.subr.bf16.mxu0 0
    %1426 = vmatpush1.bf16.msra.mxu0 %v1008
    %1427 = vmatprep.subr.bf16.mxu0 0
    %1428 = vmatpush1.bf16.msra.mxu0 %v1007
    %1429 = vmatprep.subr.bf16.mxu0 0
    %1430 = vmatpush2.bf16.msra.mxu0 %v1022
    %1431 = vmatprep.subr.bf16.mxu0 0
    %1432 = vmatpush2.bf16.msra.mxu0 %v1021
    %1433 = vmatprep.subr.bf16.mxu0 0
    %1434 = vmatpush2.bf16.msra.mxu0 %v1020
    %1435 = vmatprep.subr.bf16.mxu0 0
    %1436 = vmatpush2.bf16.msra.mxu0 %v1019
    %1437 = vmatprep.subr.bf16.mxu0 0
    %1438 = vmatpush2.bf16.msra.mxu0 %v1018
    %1439 = vmatprep.subr.bf16.mxu0 0
    %1440 = vmatpush2.bf16.msra.mxu0 %v1017
    %1441 = vmatprep.subr.bf16.mxu0 0
    %1442 = vmatpush2.bf16.msra.mxu0 %v1016
    %1443 = vmatprep.subr.bf16.mxu0 0
    %1444 = vmatpush2.bf16.msra.mxu0 %v1015
    %1445 = vmatprep.mubr.bf16.mxu0 %v380
    %1446 = vmatmul.mubr.bf16.gmra.mxu0 %v379
    %v1447 = vpop.f32.mrf.mxu0
    %v1448 = vadd.f32 %v1407, %v1447
    %v1449 = vpop.f32.mrf.mxu0
    %v1450 = vpop.f32.mrf.mxu0
    %v1451 = vadd.f32 %v1410, %v1450
    %v1452 = vpop.f32.mrf.mxu0
    %1453 = vdwg.mxu0
    %1454 = vmatprep.subr.bf16.mxu0 0
    %1455 = vmatpush1.bf16.msra.mxu0 %v1030
    %1456 = vmatprep.subr.bf16.mxu0 0
    %1457 = vmatpush1.bf16.msra.mxu0 %v1029
    %1458 = vmatprep.subr.bf16.mxu0 0
    %1459 = vmatpush1.bf16.msra.mxu0 %v1028
    %1460 = vmatprep.subr.bf16.mxu0 0
    %1461 = vmatpush1.bf16.msra.mxu0 %v1027
    %1462 = vmatprep.subr.bf16.mxu0 0
    %1463 = vmatpush1.bf16.msra.mxu0 %v1026
    %1464 = vmatprep.subr.bf16.mxu0 0
    %1465 = vmatpush1.bf16.msra.mxu0 %v1025
    %1466 = vmatprep.subr.bf16.mxu0 0
    %1467 = vmatpush1.bf16.msra.mxu0 %v1024
    %1468 = vmatprep.subr.bf16.mxu0 0
    %1469 = vmatpush1.bf16.msra.mxu0 %v1023
    %1470 = vmatprep.subr.bf16.mxu0 0
    %1471 = vmatpush2.bf16.msra.mxu0 %v1038
    %1472 = vmatprep.subr.bf16.mxu0 0
    %1473 = vmatpush2.bf16.msra.mxu0 %v1037
    %1474 = vmatprep.subr.bf16.mxu0 0
    %1475 = vmatpush2.bf16.msra.mxu0 %v1036
    %1476 = vmatprep.subr.bf16.mxu0 0
    %1477 = vmatpush2.bf16.msra.mxu0 %v1035
    %1478 = vmatprep.subr.bf16.mxu0 0
    %1479 = vmatpush2.bf16.msra.mxu0 %v1034
    %1480 = vmatprep.subr.bf16.mxu0 0
    %1481 = vmatpush2.bf16.msra.mxu0 %v1033
    %1482 = vmatprep.subr.bf16.mxu0 0
    %1483 = vmatpush2.bf16.msra.mxu0 %v1032
    %1484 = vmatprep.subr.bf16.mxu0 0
    %1485 = vmatpush2.bf16.msra.mxu0 %v1031
    %1486 = vmatprep.mubr.bf16.mxu0 %v382
    %1487 = vmatmul.mubr.bf16.gmra.mxu0 %v381
    %v1488 = vpop.f32.mrf.mxu0
    %v1489 = vadd.f32 %v1448, %v1488
    %v1490 = vpop.f32.mrf.mxu0
    %v1491 = vpop.f32.mrf.mxu0
    %v1492 = vadd.f32 %v1451, %v1491
    %v1493 = vpop.f32.mrf.mxu0
    %1494 = vdwg.mxu0
    %v1495 = vld [vmem:[%s2] sm:$0x1]
    %v1497 = vlaneseq
    %v1498 = vshrl.u32 %v1497, 7
    %v1499 = vsub.s32 0, %v1498
    %v1500 = vrot.slane %v1495, %v1499
    %v1502 = vmul.f32 %v1489, %v1500
    %v1503 = vmul.f32 %v1492, %v1500
    %v1504 = vld [vmem:[%s3] sm:$0x1]
    %v1506 = vlaneseq
    %v1507 = vshrl.u32 %v1506, 7
    %v1508 = vsub.s32 0, %v1507
    %v1509 = vrot.slane %v1504, %v1508
    %v1511 = vadd.f32 %v1502, %v1509
    %v1512 = vadd.f32 %v1503, %v1509
    %1513 = vst [vmem:[#allocation7] sm:$0xff] %v1511
    %1514 = vst [vmem:[#allocation7 + $0x8] sm:$0xff] %v1512
    // Predicated region
    $region26: #{tpu_custom_call.1} parent=1 // pred_check
      _
    $region27: #{tpu_custom_call.1} parent=1 // pred_check_branch
      %1516 = sbr.rel (0) target = $region29
    $region28: #{tpu_custom_call.1} parent=1 // pred_region
      %s1518 = ssub.s32 256, 256
      %1519 = vsyncadd [#allocation4], %s1518
      %s1520 = sshll.u32 [#allocation7], 4
      %s1521 = int_to_ptr.vmem [resolvable:$true] %s1520
      %1526 = dma.vmem_to_hbm [thread:$0]  %s1521, 256, %s4, [#allocation4], 128, 128, 8
    $region29: #{tpu_custom_call.1} parent=1 // pred_fallthru
      _
    // Predicated region
    $region30: #{tpu_custom_call.1} parent=1 // pred_check
      _
    $region31: #{tpu_custom_call.1} parent=1 // pred_check_branch
      %1528 = sbr.rel (0) target = $region33
    $region32: #{tpu_custom_call.1} parent=1 // pred_region
      %1529 = dma.done [#allocation4], 256
    $region33: #{tpu_custom_call.1} parent=1 // pred_fallthru
      _
    %1530 = vsyncpa [#allocation3], 1
    %1531 = vsyncpa [#allocation6], 1
    %1532 = vsyncpa [#allocation4], 1

</llo_original>
